<compile_context>
chip_gen: v6e
topology: v6e:2x2x1
jax: 0.10.0
libtpu: 0.0.40
codegen_flags: <defaults>
</compile_context>

<pallas_src>
import functools

import jax
import jax.numpy as jnp
from jax import lax
from jax.experimental import pallas as pl
from jax.experimental.pallas import tpu as pltpu

K = 3             # kernel_size fixed to 3 in Up_res3d
EPS = 1e-5        # nn.BatchNorm3d default eps
NEG_SLOPE = 0.01  # nn.LeakyReLU default negative_slope


def _round_up(x, m):
    return (x + m - 1) // m * m


def _dim_phase_taps(X, k, s, p, op):
    """Per-dimension sub-pixel decomposition of ConvTranspose(k, stride=s, pad=p, out_pad=op).

    Output o = s*q + r (phase r) receives w[k_orig] * x[q + b] for every tap
    (b, k_orig) with k_orig = r + p - s*b in [0, k).
    """
    Xo = (X - 1) * s - 2 * p + k + op
    assert p <= k - 1, "padding must be <= kernel_size - 1"
    # TODO(synk): support Xo % s != 0 (ragged per-phase output counts).
    assert Xo % s == 0, "phase decomposition requires stride | output size"
    Q = Xo // s
    taps = []
    for r in range(s):
        tr = []
        for ko in range(k):
            if (r + p - ko) % s == 0:
                tr.append(((r + p - ko) // s, ko))      # (input offset b, original kernel idx)
        taps.append(tr)
    all_b = [b for tr in taps for (b, _) in tr]
    bmin, bmax = min(all_b), max(all_b)
    padlo = max(0, -bmin)
    padhi = max(0, (Q - 1 + bmax) - (X - 1))
    Xp = X + padlo + padhi
    offs = sorted({b + padlo for b in all_b})           # shifted (>=0) offsets, union over phases
    tapmap = [{b + padlo: ko for (b, ko) in tr} for tr in taps]
    return Xo, Q, Xp, padlo, padhi, offs, tapmap


def _conv_phase_kernel(x_ref, w_ref, mask_ref, y_ref, ps_ref, psq_ref, *, starts, m_cols):
    """Sub-pixel transposed conv for one batch element.

    x_ref:   (1, Cin, L)  f32   flattened+padded input (lane-dense last dim)
    w_ref:   (R, T*Cin)   bf16  phase-major packed weights (taps folded into contraction)
    mask_ref:(1, M)       f32   1.0 on real output columns, 0.0 on over-read garbage
    y_ref:   (1, R, M)    f32   phase-major conv output, R = s^3*Cout
    ps/psq:  (1, R, 1)    f32   per-(phase,channel) partial sums / sums of squares
    """
    xv = x_ref[0]                                             # (Cin, L)
    # im2col: each tap is a contiguous lane slice of the flattened input.
    patches = [xv[:, s0:s0 + m_cols] for s0 in starts]
    pmat = jnp.concatenate(patches, axis=0).astype(jnp.bfloat16)   # (T*Cin, M)
    acc = jnp.dot(w_ref[...], pmat, preferred_element_type=jnp.float32)  # (R, M)
    y_ref[...] = acc[None]
    am = acc * mask_ref[...]                                  # drop garbage columns from stats
    ps_ref[...] = jnp.sum(am, axis=1, keepdims=True)[None]
    psq_ref[...] = jnp.sum(am * acc, axis=1, keepdims=True)[None]


def _bn_lrelu_add_kernel(y_ref, x2_ref, scale_ref, shift_ref, o_ref):
    """Fused BatchNorm apply + LeakyReLU + residual add on a lane-dense block."""
    z = y_ref[...] * scale_ref[...] + shift_ref[...]
    z = jnp.where(z >= 0, z, NEG_SLOPE * z)
    o_ref[...] = x2_ref[...] + z


def up_res3d_forward(x1, x2, w_t, bias, gamma, beta, *, stride, padding, output_padding):
    # x1: (N, Cin, D, H, W), x2: (N, Cout, Do, Ho, Wo)  -- native PyTorch NCDHW, no transposes.
    # `bias` is exactly cancelled by training-mode BatchNorm (shifts y and E[y] equally,
    # leaves var unchanged) -> dropped entirely.
    del bias
    N, Cin, D, H, W = x1.shape
    Cout = w_t.shape[1]
    s, p, op = stride, padding, output_padding

    Do, Qd, Dp, plo_d, phi_d, offs_d, map_d = _dim_phase_taps(D, K, s, p, op)
    Ho, Qh, Hp, plo_h, phi_h, offs_h, map_h = _dim_phase_taps(H, K, s, p, op)
    Wo, Qw, Wp, plo_w, phi_w, offs_w, map_w = _dim_phase_taps(W, K, s, p, op)

    # ---- flattened, lightly halo-padded input: (N, Cin, L); L multiple of 128 ----
    x1p = jnp.pad(x1, ((0, 0), (0, 0), (plo_d, phi_d), (plo_h, phi_h), (plo_w, phi_w)))
    L0 = Dp * Hp * Wp
    M = _round_up(Qd * Hp * Wp, 128)                 # dot columns (lanes); covers all real outputs
    starts = tuple(od * Hp * Wp + oh * Wp + ow
                   for od in offs_d for oh in offs_h for ow in offs_w)
    L = _round_up(max(starts) + M, 128)
    x1f = jnp.pad(x1p.reshape(N, Cin, L0), ((0, 0), (0, 0), (0, L - L0)))

    # ---- packed phase-major weight matrix (s^3*Cout, T*Cin): taps folded into contraction ----
    wz = jnp.zeros((Cout, Cin), w_t.dtype)
    rows = []
    for rd in range(s):
        for rh in range(s):
            for rw in range(s):
                blocks = []
                for od in offs_d:
                    for oh in offs_h:
                        for ow in offs_w:
                            if od in map_d[rd] and oh in map_h[rh] and ow in map_w[rw]:
                                kd, kh, kw = map_d[rd][od], map_h[rh][oh], map_w[rw][ow]
                                blocks.append(w_t[:, :, kd, kh, kw].T)   # (Cout, Cin)
                            else:
                                blocks.append(wz)
                rows.append(jnp.concatenate(blocks, axis=1))
    w_all = jnp.concatenate(rows, axis=0).astype(jnp.bfloat16)           # (R, T*Cin)
    R = s * s * s * Cout
    T = len(offs_d) * len(offs_h) * len(offs_w)

    # ---- validity mask over dot columns (flat over-read produces garbage columns) ----
    mcol = jnp.arange(M, dtype=jnp.int32)
    qd_i = mcol // (Hp * Wp)
    qh_i = (mcol // Wp) % Hp
    qw_i = mcol % Wp
    mask = ((qd_i < Qd) & (qh_i < Qh) & (qw_i < Qw)).astype(jnp.float32).reshape(1, M)

    y_ph, ps, psq = pl.pallas_call(
        functools.partial(_conv_phase_kernel, starts=starts, m_cols=M),
        grid=(N,),
        in_specs=[
            pl.BlockSpec((1, Cin, L), lambda n: (n, 0, 0)),
            pl.BlockSpec((R, T * Cin), lambda n: (0, 0)),
            pl.BlockSpec((1, M), lambda n: (0, 0)),
        ],
        out_specs=[
            pl.BlockSpec((1, R, M), lambda n: (n, 0, 0)),
            pl.BlockSpec((1, R, 1), lambda n: (n, 0, 0)),
            pl.BlockSpec((1, R, 1), lambda n: (n, 0, 0)),
        ],
        out_shape=[
            jax.ShapeDtypeStruct((N, R, M), jnp.float32),
            jax.ShapeDtypeStruct((N, R, 1), jnp.float32),
            jax.ShapeDtypeStruct((N, R, 1), jnp.float32),
        ],
        compiler_params=pltpu.CompilerParams(dimension_semantics=("parallel",)),
    )(x1f, w_all, mask)

    # ---- BatchNorm3d batch statistics (heavy reductions were in-kernel; tiny glue here) ----
    count = N * Do * Ho * Wo
    ch_ps = ps.reshape(N, s * s * s, Cout).sum(axis=(0, 1))
    ch_psq = psq.reshape(N, s * s * s, Cout).sum(axis=(0, 1))
    mean = ch_ps / count
    var = jnp.maximum(ch_psq / count - mean * mean, 0.0)      # clamp vs f32 cancellation
    inv = lax.rsqrt(var + EPS)
    scale = (gamma * inv).reshape(1, Cout, 1, 1)
    shift = (beta - mean * gamma * inv).reshape(1, Cout, 1, 1)

    # ---- de-interleave phase-major conv output -> NCDHW y (one fused XLA pass) ----
    yv = y_ph[:, :, :Qd * Hp * Wp].reshape(N, s, s, s, Cout, Qd, Hp, Wp)[..., :Qh, :Qw]
    y = yv.transpose(0, 4, 5, 1, 6, 2, 7, 3).reshape(N, Cout, Do, Ho, Wo)

    HW = Ho * Wo
    y2 = y.reshape(N, Cout, Do, HW)          # lane-dense (HW multiple of 128 for even W>=8)
    x2r = x2.reshape(N, Cout, Do, HW)
    bd = 8 if Do % 8 == 0 else Do            # spatial grid axis along Do

    out = pl.pallas_call(
        _bn_lrelu_add_kernel,
        grid=(N, Do // bd),
        in_specs=[
            pl.BlockSpec((1, Cout, bd, HW), lambda n, d: (n, 0, d, 0)),
            pl.BlockSpec((1, Cout, bd, HW), lambda n, d: (n, 0, d, 0)),
            pl.BlockSpec((1, Cout, 1, 1), lambda n, d: (0, 0, 0, 0)),
            pl.BlockSpec((1, Cout, 1, 1), lambda n, d: (0, 0, 0, 0)),
        ],
        out_specs=pl.BlockSpec((1, Cout, bd, HW), lambda n, d: (n, 0, d, 0)),
        out_shape=jax.ShapeDtypeStruct((N, Cout, Do, HW), jnp.float32),
        input_output_aliases={1: 0},         # out = x2 + z : reuse x2's buffer
        compiler_params=pltpu.CompilerParams(
            dimension_semantics=("parallel", "parallel")),
    )(y2, x2r, scale, shift)

    return out.reshape(N, Cout, Do, Ho, Wo)


def up_res3d_reference(x1, x2, w_t, bias, gamma, beta, *, stride, padding, output_padding):
    """Pure-JAX (XLA) reference, including the conv bias (validates its BN cancellation)."""
    s, p, op = stride, padding, output_padding
    w_conv = jnp.transpose(jnp.flip(w_t, axis=(2, 3, 4)), (2, 3, 4, 0, 1))   # (kD,kH,kW,Cin,Cout)
    y = lax.conv_general_dilated(
        x1, w_conv, window_strides=(1, 1, 1),
        padding=[(K - 1 - p, K - 1 - p + op)] * 3,
        lhs_dilation=(s, s, s),
        dimension_numbers=("NCDHW", "DHWIO", "NCDHW"))
    y = y + bias.reshape(1, -1, 1, 1, 1)
    mean = jnp.mean(y, axis=(0, 2, 3, 4), keepdims=True)
    var = jnp.var(y, axis=(0, 2, 3, 4), keepdims=True)
    z = (y - mean) / jnp.sqrt(var + EPS) * gamma.reshape(1, -1, 1, 1, 1) \
        + beta.reshape(1, -1, 1, 1, 1)
    z = jnp.where(z >= 0, z, NEG_SLOPE * z)
    return x2 + z


if __name__ == "__main__":
    key = jax.random.PRNGKey(0)
    k1, k2, k3, k4, k5, k6 = jax.random.split(key, 6)

    # Small shapes consistent with Up_res3d: upsample 8^3 -> 16^3.
    N, Cin, Cout = 2, 8, 4
    D = H = W = 8
    stride, padding, output_padding = 2, 1, 1
    Do = (D - 1) * stride - 2 * padding + K + output_padding   # = 16

    x1 = jax.random.normal(k1, (N, Cin, D, H, W), jnp.float32)
    x2 = jax.random.normal(k2, (N, Cout, Do, Do, Do), jnp.float32)
    w_t = jax.random.normal(k3, (Cin, Cout, K, K, K), jnp.float32) * 0.1
    bias = jax.random.normal(k4, (Cout,), jnp.float32) * 0.1
    gamma = jax.random.uniform(k5, (Cout,), jnp.float32, 0.5, 1.5)
    beta = jax.random.normal(k6, (Cout,), jnp.float32) * 0.1

    fwd = jax.jit(functools.partial(
        up_res3d_forward, stride=stride, padding=padding,
        output_padding=output_padding))
    out = fwd(x1, x2, w_t, bias, gamma, beta)
    jax.block_until_ready(out)

    ref = up_res3d_reference(x1, x2, w_t, bias, gamma, beta, stride=stride,
                             padding=padding, output_padding=output_padding)
    assert out.shape == (N, Cout, Do, Do, Do), out.shape
    err = float(jnp.max(jnp.abs(out - ref)))
    assert jnp.allclose(out, ref, rtol=2e-2, atol=2e-2), err
    print("KERNEL_OK")
</pallas_src>

<mosaic_0001>
module attributes {stable_mosaic.version = 11 : i64} {
  func.func @_conv_phase_kernel(%arg0: i32, %arg1: memref<1x8x896xf32, #tpu.memory_space<vmem>>, %arg2: memref<32x64xbf16, #tpu.memory_space<vmem>>, %arg3: memref<1x768xf32, #tpu.memory_space<vmem>>, %arg4: memref<1x32x768xf32, #tpu.memory_space<vmem>>, %arg5: memref<1x32x1xf32, #tpu.memory_space<vmem>>, %arg6: memref<1x32x1xf32, #tpu.memory_space<vmem>>) attributes {dimension_semantics = [#tpu.dimension_semantics<parallel>], iteration_bounds = array<i64: 2>, scalar_prefetch = 0 : i64, scratch_operands = 0 : i64, tpu.core_type = #tpu.core_type<tc>, window_params = [{transform_indices = @transform_0, window_bounds = array<i64: 1, 8, 896>}, {pipeline_mode = #tpu.pipeline_mode<synchronous>, transform_indices = @transform_1, window_bounds = array<i64: 32, 64>}, {pipeline_mode = #tpu.pipeline_mode<synchronous>, transform_indices = @transform_2, window_bounds = array<i64: 1, 768>}, {transform_indices = @transform_3, window_bounds = array<i64: 1, 32, 768>}, {transform_indices = @transform_4, window_bounds = array<i64: 1, 32, 1>}, {transform_indices = @transform_5, window_bounds = array<i64: 1, 32, 1>}]} {
    %c0 = arith.constant 0 : index
    %c0_0 = arith.constant 0 : index
    %c0_1 = arith.constant 0 : index
    %0 = vector.load %arg1[%c0, %c0_0, %c0_1] : memref<1x8x896xf32, #tpu.memory_space<vmem>>, vector<1x8x896xf32>
    %1 = vector.shape_cast %0 : vector<1x8x896xf32> to vector<8x896xf32>
    %2 = vector.extract_strided_slice %1 {offsets = [0, 0], sizes = [8, 768], strides = [1, 1]} : vector<8x896xf32> to vector<8x768xf32>
    %3 = vector.extract_strided_slice %1 {offsets = [0, 1], sizes = [8, 768], strides = [1, 1]} : vector<8x896xf32> to vector<8x768xf32>
    %4 = vector.extract_strided_slice %1 {offsets = [0, 9], sizes = [8, 768], strides = [1, 1]} : vector<8x896xf32> to vector<8x768xf32>
    %5 = vector.extract_strided_slice %1 {offsets = [0, 10], sizes = [8, 768], strides = [1, 1]} : vector<8x896xf32> to vector<8x768xf32>
    %6 = vector.extract_strided_slice %1 {offsets = [0, 81], sizes = [8, 768], strides = [1, 1]} : vector<8x896xf32> to vector<8x768xf32>
    %7 = vector.extract_strided_slice %1 {offsets = [0, 82], sizes = [8, 768], strides = [1, 1]} : vector<8x896xf32> to vector<8x768xf32>
    %8 = vector.extract_strided_slice %1 {offsets = [0, 90], sizes = [8, 768], strides = [1, 1]} : vector<8x896xf32> to vector<8x768xf32>
    %9 = vector.extract_strided_slice %1 {offsets = [0, 91], sizes = [8, 768], strides = [1, 1]} : vector<8x896xf32> to vector<8x768xf32>
    %10 = tpu.concatenate %2, %3, %4, %5, %6, %7, %8, %9 in 0 : vector<8x768xf32>, vector<8x768xf32>, vector<8x768xf32>, vector<8x768xf32>, vector<8x768xf32>, vector<8x768xf32>, vector<8x768xf32>, vector<8x768xf32> -> vector<64x768xf32>
    %11 = arith.truncf %10 : vector<64x768xf32> to vector<64x768xbf16>
    %c0_2 = arith.constant 0 : index
    %c0_3 = arith.constant 0 : index
    %12 = vector.load %arg2[%c0_2, %c0_3] : memref<32x64xbf16, #tpu.memory_space<vmem>>, vector<32x64xbf16>
    %cst = arith.constant dense<0.000000e+00> : vector<32x768xf32>
    %13 = tpu.matmul %12, %11, %cst {dimension_numbers = #tpu.dot_dimension_numbers<[1], [0], [0], [1], [0, 0, 1, 1], [], []>} : vector<32x64xbf16>, vector<64x768xbf16>, vector<32x768xf32> -> vector<32x768xf32>
    %14 = vector.shape_cast %13 : vector<32x768xf32> to vector<1x32x768xf32>
    %c0_4 = arith.constant 0 : index
    %c0_5 = arith.constant 0 : index
    %c0_6 = arith.constant 0 : index
    %15 = vector.load %arg4[%c0_4, %c0_5, %c0_6] : memref<1x32x768xf32, #tpu.memory_space<vmem>>, vector<1x32x768xf32>
    tpu.vector_store %arg4[%c0_4, %c0_5, %c0_6], %14 {strides = array<i32>} : memref<1x32x768xf32, #tpu.memory_space<vmem>>, vector<1x32x768xf32>,
    %c0_7 = arith.constant 0 : index
    %c0_8 = arith.constant 0 : index
    %16 = vector.load %arg3[%c0_7, %c0_8] : memref<1x768xf32, #tpu.memory_space<vmem>>, vector<1x768xf32>
    %17 = vector.broadcast %16 : vector<1x768xf32> to vector<32x768xf32>
    %18 = arith.mulf %13, %17 : vector<32x768xf32>
    %cst_9 = arith.constant dense<0.000000e+00> : vector<32xf32>
    %19 = vector.multi_reduction <add>, %18, %cst_9 [1] : vector<32x768xf32> to vector<32xf32>
    %20 = vector.shape_cast %19 : vector<32xf32> to vector<32x1xf32>
    %21 = vector.shape_cast %20 : vector<32x1xf32> to vector<1x32x1xf32>
    %c0_10 = arith.constant 0 : index
    %c0_11 = arith.constant 0 : index
    %c0_12 = arith.constant 0 : index
    %22 = vector.load %arg5[%c0_10, %c0_11, %c0_12] : memref<1x32x1xf32, #tpu.memory_space<vmem>>, vector<1x32x1xf32>
    tpu.vector_store %arg5[%c0_10, %c0_11, %c0_12], %21 {strides = array<i32>} : memref<1x32x1xf32, #tpu.memory_space<vmem>>, vector<1x32x1xf32>,
    %23 = arith.mulf %18, %13 : vector<32x768xf32>
    %cst_13 = arith.constant dense<0.000000e+00> : vector<32xf32>
    %24 = vector.multi_reduction <add>, %23, %cst_13 [1] : vector<32x768xf32> to vector<32xf32>
    %25 = vector.shape_cast %24 : vector<32xf32> to vector<32x1xf32>
    %26 = vector.shape_cast %25 : vector<32x1xf32> to vector<1x32x1xf32>
    %c0_14 = arith.constant 0 : index
    %c0_15 = arith.constant 0 : index
    %c0_16 = arith.constant 0 : index
    %27 = vector.load %arg6[%c0_14, %c0_15, %c0_16] : memref<1x32x1xf32, #tpu.memory_space<vmem>>, vector<1x32x1xf32>
    tpu.vector_store %arg6[%c0_14, %c0_15, %c0_16], %26 {strides = array<i32>} : memref<1x32x1xf32, #tpu.memory_space<vmem>>, vector<1x32x1xf32>,
    return
  }
  func.func @transform_0(%arg0: i32) -> (i32, i32, i32) {
    %c0_i32 = arith.constant 0 : i32
    %c0_i32_0 = arith.constant 0 : i32
    %c0_i32_1 = arith.constant 0 : i32
    return %arg0, %c0_i32, %c0_i32_0 : i32, i32, i32
  }
  func.func @transform_1(%arg0: i32) -> (i32, i32) {
    %c0_i32 = arith.constant 0 : i32
    %c0_i32_0 = arith.constant 0 : i32
    %c0_i32_1 = arith.constant 0 : i32
    return %c0_i32, %c0_i32_0 : i32, i32
  }
  func.func @transform_2(%arg0: i32) -> (i32, i32) {
    %c0_i32 = arith.constant 0 : i32
    %c0_i32_0 = arith.constant 0 : i32
    %c0_i32_1 = arith.constant 0 : i32
    return %c0_i32, %c0_i32_0 : i32, i32
  }
  func.func @transform_3(%arg0: i32) -> (i32, i32, i32) {
    %c0_i32 = arith.constant 0 : i32
    %c0_i32_0 = arith.constant 0 : i32
    %c0_i32_1 = arith.constant 0 : i32
    return %arg0, %c0_i32, %c0_i32_0 : i32, i32, i32
  }
  func.func @transform_4(%arg0: i32) -> (i32, i32, i32) {
    %c0_i32 = arith.constant 0 : i32
    %c0_i32_0 = arith.constant 0 : i32
    %c0_i32_1 = arith.constant 0 : i32
    return %arg0, %c0_i32, %c0_i32_0 : i32, i32, i32
  }
  func.func @transform_5(%arg0: i32) -> (i32, i32, i32) {
    %c0_i32 = arith.constant 0 : i32
    %c0_i32_0 = arith.constant 0 : i32
    %c0_i32_1 = arith.constant 0 : i32
    return %arg0, %c0_i32, %c0_i32_0 : i32, i32, i32
  }
}

module attributes {stable_mosaic.version = 11 : i64} {
  func.func @_bn_lrelu_add_kernel(%arg0: i32, %arg1: i32, %arg2: memref<1x4x8x256xf32, #tpu.memory_space<vmem>>, %arg3: memref<1x4x8x256xf32, #tpu.memory_space<vmem>>, %arg4: memref<1x4x1x1xf32, #tpu.memory_space<vmem>>, %arg5: memref<1x4x1x1xf32, #tpu.memory_space<vmem>>, %arg6: memref<1x4x8x256xf32, #tpu.memory_space<vmem>>) attributes {dimension_semantics = [#tpu.dimension_semantics<parallel>, #tpu.dimension_semantics<parallel>], iteration_bounds = array<i64: 2, 2>, scalar_prefetch = 0 : i64, scratch_operands = 0 : i64, tpu.core_type = #tpu.core_type<tc>, window_params = [{transform_indices = @transform_0, window_bounds = array<i64: 1, 4, 8, 256>}, {transform_indices = @transform_1, window_bounds = array<i64: 1, 4, 8, 256>}, {pipeline_mode = #tpu.pipeline_mode<synchronous>, transform_indices = @transform_2, window_bounds = array<i64: 1, 4, 1, 1>}, {pipeline_mode = #tpu.pipeline_mode<synchronous>, transform_indices = @transform_3, window_bounds = array<i64: 1, 4, 1, 1>}, {transform_indices = @transform_4, window_bounds = array<i64: 1, 4, 8, 256>}]} {
    %c0 = arith.constant 0 : index
    %c0_0 = arith.constant 0 : index
    %c0_1 = arith.constant 0 : index
    %c0_2 = arith.constant 0 : index
    %0 = vector.load %arg2[%c0, %c0_0, %c0_1, %c0_2] : memref<1x4x8x256xf32, #tpu.memory_space<vmem>>, vector<1x4x8x256xf32>
    %c0_3 = arith.constant 0 : index
    %c0_4 = arith.constant 0 : index
    %c0_5 = arith.constant 0 : index
    %c0_6 = arith.constant 0 : index
    %1 = vector.load %arg4[%c0_3, %c0_4, %c0_5, %c0_6] : memref<1x4x1x1xf32, #tpu.memory_space<vmem>>, vector<1x4x1x1xf32>
    %2 = vector.broadcast %1 : vector<1x4x1x1xf32> to vector<1x4x8x256xf32>
    %3 = arith.mulf %0, %2 : vector<1x4x8x256xf32>
    %c0_7 = arith.constant 0 : index
    %c0_8 = arith.constant 0 : index
    %c0_9 = arith.constant 0 : index
    %c0_10 = arith.constant 0 : index
    %4 = vector.load %arg5[%c0_7, %c0_8, %c0_9, %c0_10] : memref<1x4x1x1xf32, #tpu.memory_space<vmem>>, vector<1x4x1x1xf32>
    %5 = vector.broadcast %4 : vector<1x4x1x1xf32> to vector<1x4x8x256xf32>
    %6 = arith.addf %3, %5 : vector<1x4x8x256xf32>
    %cst = arith.constant 0.000000e+00 : f32
    %7 = vector.broadcast %cst : f32 to vector<1x4x8x256xf32>
    %8 = arith.cmpf oge, %6, %7 : vector<1x4x8x256xf32>
    %cst_11 = arith.constant 0.00999999977 : f32
    %9 = vector.broadcast %cst_11 : f32 to vector<1x4x8x256xf32>
    %10 = arith.mulf %9, %6 : vector<1x4x8x256xf32>
    %11 = arith.select %8, %6, %10 : vector<1x4x8x256xi1>, vector<1x4x8x256xf32>
    %c0_12 = arith.constant 0 : index
    %c0_13 = arith.constant 0 : index
    %c0_14 = arith.constant 0 : index
    %c0_15 = arith.constant 0 : index
    %12 = vector.load %arg3[%c0_12, %c0_13, %c0_14, %c0_15] : memref<1x4x8x256xf32, #tpu.memory_space<vmem>>, vector<1x4x8x256xf32>
    %13 = arith.addf %12, %11 : vector<1x4x8x256xf32>
    %c0_16 = arith.constant 0 : index
    %c0_17 = arith.constant 0 : index
    %c0_18 = arith.constant 0 : index
    %c0_19 = arith.constant 0 : index
    %14 = vector.load %arg6[%c0_16, %c0_17, %c0_18, %c0_19] : memref<1x4x8x256xf32, #tpu.memory_space<vmem>>, vector<1x4x8x256xf32>
    tpu.vector_store %arg6[%c0_16, %c0_17, %c0_18, %c0_19], %13 {strides = array<i32>} : memref<1x4x8x256xf32, #tpu.memory_space<vmem>>, vector<1x4x8x256xf32>,
    return
  }
  func.func @transform_0(%arg0: i32, %arg1: i32) -> (i32, i32, i32, i32) {
    %c0_i32 = arith.constant 0 : i32
    %c0_i32_0 = arith.constant 0 : i32
    %c0_i32_1 = arith.constant 0 : i32
    return %arg0, %c0_i32, %arg1, %c0_i32_0 : i32, i32, i32, i32
  }
  func.func @transform_1(%arg0: i32, %arg1: i32) -> (i32, i32, i32, i32) {
    %c0_i32 = arith.constant 0 : i32
    %c0_i32_0 = arith.constant 0 : i32
    %c0_i32_1 = arith.constant 0 : i32
    return %arg0, %c0_i32, %arg1, %c0_i32_0 : i32, i32, i32, i32
  }
  func.func @transform_2(%arg0: i32, %arg1: i32) -> (i32, i32, i32, i32) {
    %c0_i32 = arith.constant 0 : i32
    %c0_i32_0 = arith.constant 0 : i32
    %c0_i32_1 = arith.constant 0 : i32
    %c0_i32_2 = arith.constant 0 : i32
    %c0_i32_3 = arith.constant 0 : i32
    return %c0_i32, %c0_i32_0, %c0_i32_1, %c0_i32_2 : i32, i32, i32, i32
  }
  func.func @transform_3(%arg0: i32, %arg1: i32) -> (i32, i32, i32, i32) {
    %c0_i32 = arith.constant 0 : i32
    %c0_i32_0 = arith.constant 0 : i32
    %c0_i32_1 = arith.constant 0 : i32
    %c0_i32_2 = arith.constant 0 : i32
    %c0_i32_3 = arith.constant 0 : i32
    return %c0_i32, %c0_i32_0, %c0_i32_1, %c0_i32_2 : i32, i32, i32, i32
  }
  func.func @transform_4(%arg0: i32, %arg1: i32) -> (i32, i32, i32, i32) {
    %c0_i32 = arith.constant 0 : i32
    %c0_i32_0 = arith.constant 0 : i32
    %c0_i32_1 = arith.constant 0 : i32
    return %arg0, %c0_i32, %arg1, %c0_i32_0 : i32, i32, i32, i32
  }
}

</mosaic_0001>

<llo_original>
// kernel: up_res3d_forward.2
$region0: #{up_res3d_forward.2}
  #allocation0 [shape = 'u32[]', space=smem, size = 0x4, offset = 0x4, fixed_abs, tag = 'smem constant byte address 0x4 - core index']
  #allocation1 [shape = 'u32[144,128]{1,0:T(1,128)}', space=vmem, size = 0x12000, scoped, tag = 'internal scratch']
  %s0 = inlined_call_operand.vmem [shape: f32[2,8,896], index: 0, kind: input, shape index: {}]
  %s1 = inlined_call_operand.vmem [shape: bf16[32,64], index: 1, kind: input, shape index: {}]
  %s2 = inlined_call_operand.vmem [shape: f32[1,768], index: 2, kind: input, shape index: {}]
  %s3 = inlined_call_operand.vmem [shape: f32[2,32,768], index: 3, kind: output, shape index: {0}]
  %s4 = inlined_call_operand.vmem [shape: f32[2,32,1], index: 4, kind: output, shape index: {1}]
  %s5 = inlined_call_operand.vmem [shape: f32[2,32,1], index: 5, kind: output, shape index: {2}]
  %6 = xla_tuple %s3, %s4, %s5
  %s7 = sld [smem:[#allocation0]]
  $region61: #{up_res3d_forward.2} parent=0
    _
  %s9 = ssub.s32 1, %s7
  %s10 = scalar_select 0, %s9, %s7
  loop: start=0, step=1, limit=4
  $region2: #{up_res3d_forward.2} parent=0 // loop_pre_header
    _
  $region3: #{up_res3d_forward.2} parent=0 // loop_header
    %s12 = sphi 0, %s16
    %p13 = scmp.ge.s32.totalorder %s12, 4
    %s22 = sphi 0, %s24
    %s25 = sphi 0, %s22
    %s26 = sphi 0, %s25
    %s42 = sphi 0, %s26
    %s46 = sphi 0, %s46
    %s48 = sphi 0, %s46
    %s49 = sphi 0, %s48
    %s63 = sphi 0, %s49
    %s67 = sphi 0, %s67
    %s69 = sphi 0, %s67
    %s70 = sphi 0, %s69
    %s84 = sphi 0, %s70
    %s90 = sphi 0, %s92
    %s93 = sphi 0, %s90
    %s94 = sphi 0, %s93
    %s110 = sphi 0, %s94
    %s116 = sphi 0, %s118
    %s119 = sphi 0, %s116
    %s120 = sphi 0, %s119
    %s136 = sphi 0, %s120
    %s142 = sphi 0, %s144
    %s145 = sphi 0, %s142
    %s146 = sphi 0, %s145
    %s162 = sphi 0, %s146
  $region4: #{up_res3d_forward.2} parent=0 // loop_header_branch
    %15 = sbr.rel (%p13) target = $region8
  $region5: #{up_res3d_forward.2} parent=0 // loop_body
    %s17 = ssub.s32 %s12, 1
    %s18 = ssub.s32 %s12, 2
    %s19 = sadd.s32 %s12, 1
    %s20 = ssub.s32 %s12, %s19
    %p21 = scmp.eq.s32.totalorder %s20, 0
    %s23 = sadd.s32 %s22, 1
    %s24 = scalar_select %p21, %s22, %s23
    %p27 = pneg %p21
    %p28 = scmp.eq.s32.totalorder %s12, 1
    %p29 = por %p27, %p28
    %p30 = scmp.ne.s32.totalorder %s22, %s25
    %p31 = scmp.eq.s32.totalorder %s12, 0
    %p32 = por %p30, %p31
    %p33 = scmp.ne.s32.totalorder %s22, %s25
    %p34 = scmp.eq.s32.totalorder %s17, 1
    %p35 = por %p33, %p34
    %p36 = scmp.ne.s32.totalorder %s25, %s26
    %p37 = scmp.eq.s32.totalorder %s17, 0
    %p38 = por %p36, %p37
    %p39 = scmp.ne.s32.totalorder %s25, %s26
    %p40 = scmp.eq.s32.totalorder %s18, 1
    %p41 = por %p39, %p40
    %p43 = scmp.ne.s32.totalorder %s26, %s42
    %p44 = scmp.eq.s32.totalorder %s18, 0
    %p45 = por %p43, %p44
    %s47 = sadd.s32 %s46, 1
    %p50 = scmp.eq.s32.totalorder %s12, 1
    %p51 = scmp.ne.s32.totalorder %s46, %s48
    %p52 = scmp.eq.s32.totalorder %s12, 0
    %p53 = por %p51, %p52
    %p54 = scmp.ne.s32.totalorder %s46, %s48
    %p55 = scmp.eq.s32.totalorder %s17, 1
    %p56 = por %p54, %p55
    %p57 = scmp.ne.s32.totalorder %s48, %s49
    %p58 = scmp.eq.s32.totalorder %s17, 0
    %p59 = por %p57, %p58
    %p60 = scmp.ne.s32.totalorder %s48, %s49
    %p61 = scmp.eq.s32.totalorder %s18, 1
    %p62 = por %p60, %p61
    %p64 = scmp.ne.s32.totalorder %s49, %s63
    %p65 = scmp.eq.s32.totalorder %s18, 0
    %p66 = por %p64, %p65
    %s68 = sadd.s32 %s67, 1
    %p71 = scmp.eq.s32.totalorder %s12, 1
    %p72 = scmp.ne.s32.totalorder %s67, %s69
    %p73 = scmp.eq.s32.totalorder %s12, 0
    %p74 = por %p72, %p73
    %p75 = scmp.ne.s32.totalorder %s67, %s69
    %p76 = scmp.eq.s32.totalorder %s17, 1
    %p77 = por %p75, %p76
    %p78 = scmp.ne.s32.totalorder %s69, %s70
    %p79 = scmp.eq.s32.totalorder %s17, 0
    %p80 = por %p78, %p79
    %p81 = scmp.ne.s32.totalorder %s69, %s70
    %p82 = scmp.eq.s32.totalorder %s18, 1
    %p83 = por %p81, %p82
    %p85 = scmp.ne.s32.totalorder %s70, %s84
    %p86 = scmp.eq.s32.totalorder %s18, 0
    %p87 = por %p85, %p86
    %s88 = ssub.s32 %s12, %s19
    %p89 = scmp.eq.s32.totalorder %s88, 0
    %s91 = sadd.s32 %s90, 1
    %s92 = scalar_select %p89, %s90, %s91
    %p95 = pneg %p89
    %p96 = scmp.eq.s32.totalorder %s12, 1
    %p97 = por %p95, %p96
    %p98 = scmp.ne.s32.totalorder %s90, %s93
    %p99 = scmp.eq.s32.totalorder %s12, 0
    %p100 = por %p98, %p99
    %p101 = scmp.ne.s32.totalorder %s90, %s93
    %p102 = scmp.eq.s32.totalorder %s17, 1
    %p103 = por %p101, %p102
    %p104 = scmp.ne.s32.totalorder %s93, %s94
    %p105 = scmp.eq.s32.totalorder %s17, 0
    %p106 = por %p104, %p105
    %p107 = scmp.ne.s32.totalorder %s93, %s94
    %p108 = scmp.eq.s32.totalorder %s18, 1
    %p109 = por %p107, %p108
    %p111 = scmp.ne.s32.totalorder %s94, %s110
    %p112 = scmp.eq.s32.totalorder %s18, 0
    %p113 = por %p111, %p112
    %s114 = ssub.s32 %s12, %s19
    %p115 = scmp.eq.s32.totalorder %s114, 0
    %s117 = sadd.s32 %s116, 1
    %s118 = scalar_select %p115, %s116, %s117
    %p121 = pneg %p115
    %p122 = scmp.eq.s32.totalorder %s12, 1
    %p123 = por %p121, %p122
    %p124 = scmp.ne.s32.totalorder %s116, %s119
    %p125 = scmp.eq.s32.totalorder %s12, 0
    %p126 = por %p124, %p125
    %p127 = scmp.ne.s32.totalorder %s116, %s119
    %p128 = scmp.eq.s32.totalorder %s17, 1
    %p129 = por %p127, %p128
    %p130 = scmp.ne.s32.totalorder %s119, %s120
    %p131 = scmp.eq.s32.totalorder %s17, 0
    %p132 = por %p130, %p131
    %p133 = scmp.ne.s32.totalorder %s119, %s120
    %p134 = scmp.eq.s32.totalorder %s18, 1
    %p135 = por %p133, %p134
    %p137 = scmp.ne.s32.totalorder %s120, %s136
    %p138 = scmp.eq.s32.totalorder %s18, 0
    %p139 = por %p137, %p138
    %s140 = ssub.s32 %s12, %s19
    %p141 = scmp.eq.s32.totalorder %s140, 0
    %s143 = sadd.s32 %s142, 1
    %s144 = scalar_select %p141, %s142, %s143
    %p147 = pneg %p141
    %p148 = scmp.eq.s32.totalorder %s12, 1
    %p149 = por %p147, %p148
    %p150 = scmp.ne.s32.totalorder %s142, %s145
    %p151 = scmp.eq.s32.totalorder %s12, 0
    %p152 = por %p150, %p151
    %p153 = scmp.ne.s32.totalorder %s142, %s145
    %p154 = scmp.eq.s32.totalorder %s17, 1
    %p155 = por %p153, %p154
    %p156 = scmp.ne.s32.totalorder %s145, %s146
    %p157 = scmp.eq.s32.totalorder %s17, 0
    %p158 = por %p156, %p157
    %p159 = scmp.ne.s32.totalorder %s145, %s146
    %p160 = scmp.eq.s32.totalorder %s18, 1
    %p161 = por %p159, %p160
    %p163 = scmp.ne.s32.totalorder %s146, %s162
    %p164 = scmp.eq.s32.totalorder %s18, 0
    %p165 = por %p163, %p164
    %p166 = scmp.le.s32.totalorder 1, %s12
    %p167 = scmp.lt.s32.totalorder %s12, 3
    %p168 = pnand %p166, %p167
    %p169 = pneg %p168
    // Predicated region
    $region9: #{up_res3d_forward.2} parent=5 // pred_check
      _
    $region10: #{up_res3d_forward.2} parent=5 // pred_check_branch
      %171 = sbr.rel (%p168) target = $region12
    $region11: #{up_res3d_forward.2} parent=5 // pred_region
      %s172 = ssub.s32 %s12, 1
      // Predicated region
      $region13: #{up_res3d_forward.2} parent=11 // pred_check
        %p173 = pneg %p59
      $region14: #{up_res3d_forward.2} parent=11 // pred_check_branch
        %175 = sbr.rel (%p173) target = $region16
      $region15: #{up_res3d_forward.2} parent=11 // pred_region
        _
      $region16: #{up_res3d_forward.2} parent=11 // pred_fallthru
        _
      // Predicated region
      $region17: #{up_res3d_forward.2} parent=11 // pred_check
        %p176 = pneg %p80
      $region18: #{up_res3d_forward.2} parent=11 // pred_check_branch
        %178 = sbr.rel (%p176) target = $region20
      $region19: #{up_res3d_forward.2} parent=11 // pred_region
        _
      $region20: #{up_res3d_forward.2} parent=11 // pred_fallthru
        _
    $region12: #{up_res3d_forward.2} parent=5 // pred_fallthru
      _
    %p179 = scmp.lt.s32.totalorder %s12, 2
    // Predicated region
    $region21: #{up_res3d_forward.2} parent=5 // pred_check
      %p180 = pneg %p179
    $region22: #{up_res3d_forward.2} parent=5 // pred_check_branch
      %182 = sbr.rel (%p180) target = $region24
    $region23: #{up_res3d_forward.2} parent=5 // pred_region
      // Predicated region
      $region25: #{up_res3d_forward.2} parent=23 // pred_check
        %p183 = pneg %p32
      $region26: #{up_res3d_forward.2} parent=23 // pred_check_branch
        %185 = sbr.rel (%p183) target = $region28
      $region27: #{up_res3d_forward.2} parent=23 // pred_region
        %p186 = scmp.lt.s32.totalorder %s12, 1
        %s187 = scalar_select %p186, %s12, 1
        %s188 = smul.addr %s187, 7
        %s189 = smul.addr %s188, 8
        %s190 = scalar_lea.vmem %s0, %s189
      $region28: #{up_res3d_forward.2} parent=23 // pred_fallthru
        _
    $region24: #{up_res3d_forward.2} parent=5 // pred_fallthru
      _
    %p191 = scmp.le.s32.totalorder 1, %s12
    %p192 = scmp.lt.s32.totalorder %s12, 3
    %p193 = pnand %p191, %p192
    %p194 = pneg %p193
    // Predicated region
    $region29: #{up_res3d_forward.2} parent=5 // pred_check
      _
    $region30: #{up_res3d_forward.2} parent=5 // pred_check_branch
      %196 = sbr.rel (%p193) target = $region32
    $region31: #{up_res3d_forward.2} parent=5 // pred_region
      %s197 = ssub.s32 %s12, 1
      %p198 = scmp.lt.s32.totalorder %s17, 1
      %s199 = scalar_select %p198, %s17, 1
      %s200 = smul.addr %s199, 7
      %s201 = smul.addr %s200, 8
      %s202 = scalar_lea.vmem %s0, %s201
      %p203 = pneg %p38
      %p204 = pneg %p35
      %p205 = pneg %p59
      %p206 = pneg %p56
      %p207 = pneg %p80
      %p208 = pneg %p77
      %p209 = pneg %p106
      %p210 = pneg %p103
      %p211 = scmp.lt.s32.totalorder %s17, 1
      %s212 = scalar_select %p211, %s17, 1
      %s213 = smul.addr %s212, 24
      %s214 = smul.addr %s213, 8
      %s215 = scalar_lea.vmem %s3, %s214
      %p216 = pneg %p132
      %p217 = pneg %p129
      %p218 = scmp.lt.s32.totalorder %s17, 1
      %s219 = scalar_select %p218, %s17, 1
      %s220 = smul.addr %s219, 4
      %s221 = smul.addr %s220, 8
      %s222 = scalar_lea.vmem %s4, %s221
      %p223 = pneg %p158
      %p224 = pneg %p155
      %p225 = scmp.lt.s32.totalorder %s17, 1
      %s226 = scalar_select %p225, %s17, 1
      %s227 = smul.addr %s226, 4
      %s228 = smul.addr %s227, 8
      %s229 = scalar_lea.vmem %s5, %s228
      %p230 = scmp.lt.s32.totalorder %s17, 1
      %s231 = scalar_select %p230, %s17, 1
      %s232 = smul.addr %s231, 7
      %s233 = smul.addr %s232, 8
      %s234 = scalar_lea.vmem %s0, %s233
      %p235 = scmp.lt.s32.totalorder %s17, 1
      %s236 = scalar_select %p235, %s17, 1
      %s237 = smul.addr %s236, 24
      %s238 = smul.addr %s237, 8
      %s239 = scalar_lea.vmem %s3, %s238
      %p240 = scmp.lt.s32.totalorder %s17, 1
      %s241 = scalar_select %p240, %s17, 1
      %s242 = smul.addr %s241, 4
      %s243 = smul.addr %s242, 8
      %s244 = scalar_lea.vmem %s4, %s243
      %p245 = scmp.lt.s32.totalorder %s17, 1
      %s246 = scalar_select %p245, %s17, 1
      %s247 = smul.addr %s246, 4
      %s248 = smul.addr %s247, 8
      %s249 = scalar_lea.vmem %s5, %s248
      %v251 = vld [vmem:[%s234] sm:$0xff]
      %v252 = vld [vmem:[%s234 + $0x8] sm:$0xff]
      %v253 = vld [vmem:[%s234 + $0x10] sm:$0xff]
      %v254 = vld [vmem:[%s234 + $0x18] sm:$0xff]
      %v255 = vld [vmem:[%s234 + $0x20] sm:$0xff]
      %v256 = vld [vmem:[%s234 + $0x28] sm:$0xff]
      %v257 = vld [vmem:[%s234 + $0x30] sm:$0xff]
      %265 = vrot.lane.b32.xlu0 %v251, 127
      %v266 = vpop.permute.xlu0 %265
      %267 = vrot.lane.b32.xlu0 %v252, 127
      %v268 = vpop.permute.xlu0 %267
      %269 = vrot.lane.b32.xlu0 %v253, 127
      %v270 = vpop.permute.xlu0 %269
      %271 = vrot.lane.b32.xlu0 %v254, 127
      %v272 = vpop.permute.xlu0 %271
      %273 = vrot.lane.b32.xlu0 %v255, 127
      %v274 = vpop.permute.xlu0 %273
      %275 = vrot.lane.b32.xlu0 %v256, 127
      %v276 = vpop.permute.xlu0 %275
      %277 = vrot.lane.b32.xlu0 %v257, 127
      %v278 = vpop.permute.xlu0 %277
      %vm279 = vcmask 1039360
      %v280 = vsel %vm279, %v266, %v268
      %v281 = vsel %vm279, %v268, %v270
      %v282 = vsel %vm279, %v270, %v272
      %v283 = vsel %vm279, %v272, %v274
      %v284 = vsel %vm279, %v274, %v276
      %v285 = vsel %vm279, %v276, %v278
      %292 = vrot.lane.b32.xlu0 %v251, 119
      %v293 = vpop.permute.xlu0 %292
      %294 = vrot.lane.b32.xlu0 %v252, 119
      %v295 = vpop.permute.xlu0 %294
      %296 = vrot.lane.b32.xlu0 %v253, 119
      %v297 = vpop.permute.xlu0 %296
      %298 = vrot.lane.b32.xlu0 %v254, 119
      %v299 = vpop.permute.xlu0 %298
      %300 = vrot.lane.b32.xlu0 %v255, 119
      %v301 = vpop.permute.xlu0 %300
      %302 = vrot.lane.b32.xlu0 %v256, 119
      %v303 = vpop.permute.xlu0 %302
      %304 = vrot.lane.b32.xlu0 %v257, 119
      %v305 = vpop.permute.xlu0 %304
      %vm306 = vcmask 973824
      %v307 = vsel %vm306, %v293, %v295
      %v308 = vsel %vm306, %v295, %v297
      %v309 = vsel %vm306, %v297, %v299
      %v310 = vsel %vm306, %v299, %v301
      %v311 = vsel %vm306, %v301, %v303
      %v312 = vsel %vm306, %v303, %v305
      %319 = vrot.lane.b32.xlu0 %v251, 118
      %v320 = vpop.permute.xlu0 %319
      %321 = vrot.lane.b32.xlu0 %v252, 118
      %v322 = vpop.permute.xlu0 %321
      %323 = vrot.lane.b32.xlu0 %v253, 118
      %v324 = vpop.permute.xlu0 %323
      %325 = vrot.lane.b32.xlu0 %v254, 118
      %v326 = vpop.permute.xlu0 %325
      %327 = vrot.lane.b32.xlu0 %v255, 118
      %v328 = vpop.permute.xlu0 %327
      %329 = vrot.lane.b32.xlu0 %v256, 118
      %v330 = vpop.permute.xlu0 %329
      %331 = vrot.lane.b32.xlu0 %v257, 118
      %v332 = vpop.permute.xlu0 %331
      %vm333 = vcmask 965632
      %v334 = vsel %vm333, %v320, %v322
      %v335 = vsel %vm333, %v322, %v324
      %v336 = vsel %vm333, %v324, %v326
      %v337 = vsel %vm333, %v326, %v328
      %v338 = vsel %vm333, %v328, %v330
      %v339 = vsel %vm333, %v330, %v332
      %346 = vrot.lane.b32.xlu0 %v251, 47
      %v347 = vpop.permute.xlu0 %346
      %348 = vrot.lane.b32.xlu0 %v252, 47
      %v349 = vpop.permute.xlu0 %348
      %350 = vrot.lane.b32.xlu0 %v253, 47
      %v351 = vpop.permute.xlu0 %350
      %352 = vrot.lane.b32.xlu0 %v254, 47
      %v353 = vpop.permute.xlu0 %352
      %354 = vrot.lane.b32.xlu0 %v255, 47
      %v355 = vpop.permute.xlu0 %354
      %356 = vrot.lane.b32.xlu0 %v256, 47
      %v357 = vpop.permute.xlu0 %356
      %358 = vrot.lane.b32.xlu0 %v257, 47
      %v359 = vpop.permute.xlu0 %358
      %vm360 = vcmask 384000
      %v361 = vsel %vm360, %v347, %v349
      %v362 = vsel %vm360, %v349, %v351
      %v363 = vsel %vm360, %v351, %v353
      %v364 = vsel %vm360, %v353, %v355
      %v365 = vsel %vm360, %v355, %v357
      %v366 = vsel %vm360, %v357, %v359
      %373 = vrot.lane.b32.xlu0 %v251, 46
      %v374 = vpop.permute.xlu0 %373
      %375 = vrot.lane.b32.xlu0 %v252, 46
      %v376 = vpop.permute.xlu0 %375
      %377 = vrot.lane.b32.xlu0 %v253, 46
      %v378 = vpop.permute.xlu0 %377
      %379 = vrot.lane.b32.xlu0 %v254, 46
      %v380 = vpop.permute.xlu0 %379
      %381 = vrot.lane.b32.xlu0 %v255, 46
      %v382 = vpop.permute.xlu0 %381
      %383 = vrot.lane.b32.xlu0 %v256, 46
      %v384 = vpop.permute.xlu0 %383
      %385 = vrot.lane.b32.xlu0 %v257, 46
      %v386 = vpop.permute.xlu0 %385
      %vm387 = vcmask 375808
      %v388 = vsel %vm387, %v374, %v376
      %v389 = vsel %vm387, %v376, %v378
      %v390 = vsel %vm387, %v378, %v380
      %v391 = vsel %vm387, %v380, %v382
      %v392 = vsel %vm387, %v382, %v384
      %v393 = vsel %vm387, %v384, %v386
      %400 = vrot.lane.b32.xlu0 %v251, 38
      %v401 = vpop.permute.xlu0 %400
      %402 = vrot.lane.b32.xlu0 %v252, 38
      %v403 = vpop.permute.xlu0 %402
      %404 = vrot.lane.b32.xlu0 %v253, 38
      %v405 = vpop.permute.xlu0 %404
      %406 = vrot.lane.b32.xlu0 %v254, 38
      %v407 = vpop.permute.xlu0 %406
      %408 = vrot.lane.b32.xlu0 %v255, 38
      %v409 = vpop.permute.xlu0 %408
      %410 = vrot.lane.b32.xlu0 %v256, 38
      %v411 = vpop.permute.xlu0 %410
      %412 = vrot.lane.b32.xlu0 %v257, 38
      %v413 = vpop.permute.xlu0 %412
      %vm414 = vcmask 310272
      %v415 = vsel %vm414, %v401, %v403
      %v416 = vsel %vm414, %v403, %v405
      %v417 = vsel %vm414, %v405, %v407
      %v418 = vsel %vm414, %v407, %v409
      %v419 = vsel %vm414, %v409, %v411
      %v420 = vsel %vm414, %v411, %v413
      %427 = vrot.lane.b32.xlu0 %v251, 37
      %v428 = vpop.permute.xlu0 %427
      %429 = vrot.lane.b32.xlu0 %v252, 37
      %v430 = vpop.permute.xlu0 %429
      %431 = vrot.lane.b32.xlu0 %v253, 37
      %v432 = vpop.permute.xlu0 %431
      %433 = vrot.lane.b32.xlu0 %v254, 37
      %v434 = vpop.permute.xlu0 %433
      %435 = vrot.lane.b32.xlu0 %v255, 37
      %v436 = vpop.permute.xlu0 %435
      %437 = vrot.lane.b32.xlu0 %v256, 37
      %v438 = vpop.permute.xlu0 %437
      %439 = vrot.lane.b32.xlu0 %v257, 37
      %v440 = vpop.permute.xlu0 %439
      %vm441 = vcmask 302080
      %v442 = vsel %vm441, %v428, %v430
      %v443 = vsel %vm441, %v430, %v432
      %v444 = vsel %vm441, %v432, %v434
      %v445 = vsel %vm441, %v434, %v436
      %v446 = vsel %vm441, %v436, %v438
      %v447 = vsel %vm441, %v438, %v440
      %v454 = vpack.c.bf16 %v280, %v251
      %v455 = vpack.c.bf16 %v281, %v252
      %v456 = vpack.c.bf16 %v282, %v253
      %v457 = vpack.c.bf16 %v283, %v254
      %v458 = vpack.c.bf16 %v284, %v255
      %v459 = vpack.c.bf16 %v285, %v256
      %v460 = vpack.c.bf16 %v334, %v307
      %v461 = vpack.c.bf16 %v335, %v308
      %v462 = vpack.c.bf16 %v336, %v309
      %v463 = vpack.c.bf16 %v337, %v310
      %v464 = vpack.c.bf16 %v338, %v311
      %v465 = vpack.c.bf16 %v339, %v312
      %v466 = vpack.c.bf16 %v388, %v361
      %v467 = vpack.c.bf16 %v389, %v362
      %v468 = vpack.c.bf16 %v390, %v363
      %v469 = vpack.c.bf16 %v391, %v364
      %v470 = vpack.c.bf16 %v392, %v365
      %v471 = vpack.c.bf16 %v393, %v366
      %v472 = vpack.c.bf16 %v442, %v415
      %v473 = vpack.c.bf16 %v443, %v416
      %v474 = vpack.c.bf16 %v444, %v417
      %v475 = vpack.c.bf16 %v445, %v418
      %v476 = vpack.c.bf16 %v446, %v419
      %v477 = vpack.c.bf16 %v447, %v420
      %v478 = vld [vmem:[%s1] sm:$0xf]
      %v479 = vld [vmem:[%s1 + $0x4] sm:$0xf]
      %v480 = vld [vmem:[%s1 + $0x8] sm:$0xf]
      %v481 = vld [vmem:[%s1 + $0xc] sm:$0xf]
      %v486 = vunpack.c.l.b16 %v478
      %v487 = vunpack.c.l.b16 %v479
      %v488 = vunpack.c.l.b16 %v480
      %v489 = vunpack.c.l.b16 %v481
      %v490 = vpack.c.b16 %v487, %v486
      %v491 = vpack.c.b16 %v489, %v488
      %vm492 = vcmask 523264
      %v494 = vsel %vm492, %v490, 0
      %v497 = vsel %vm492, %v491, 0
      %499 = vmatprep.subr.bf16.mxu0 0
      %500 = vmatpush1.bf16.msra.mxu0 0
      %501 = vmatprep.subr.bf16.mxu0 0
      %502 = vmatpush1.bf16.msra.mxu0 0
      %503 = vmatprep.subr.bf16.mxu0 0
      %504 = vmatpush1.bf16.msra.mxu0 0
      %505 = vmatprep.subr.bf16.mxu0 0
      %506 = vmatpush1.bf16.msra.mxu0 0
      %507 = vmatprep.subr.bf16.mxu0 %v473
      %508 = vmatpush1.bf16.msra.mxu0 %v472
      %509 = vmatprep.subr.bf16.mxu0 %v467
      %510 = vmatpush1.bf16.msra.mxu0 %v466
      %511 = vmatprep.subr.bf16.mxu0 %v461
      %512 = vmatpush1.bf16.msra.mxu0 %v460
      %513 = vmatprep.subr.bf16.mxu0 %v455
      %514 = vmatpush1.bf16.msra.mxu0 %v454
      %515 = vmatprep.subr.bf16.mxu0 0
      %516 = vmatpush2.bf16.msra.mxu0 0
      %517 = vmatprep.subr.bf16.mxu0 0
      %518 = vmatpush2.bf16.msra.mxu0 0
      %519 = vmatprep.subr.bf16.mxu0 0
      %520 = vmatpush2.bf16.msra.mxu0 0
      %521 = vmatprep.subr.bf16.mxu0 0
      %522 = vmatpush2.bf16.msra.mxu0 0
      %523 = vmatprep.subr.bf16.mxu0 0
      %524 = vmatpush2.bf16.msra.mxu0 0
      %525 = vmatprep.subr.bf16.mxu0 0
      %526 = vmatpush2.bf16.msra.mxu0 0
      %527 = vmatprep.subr.bf16.mxu0 0
      %528 = vmatpush2.bf16.msra.mxu0 0
      %529 = vmatprep.subr.bf16.mxu0 0
      %530 = vmatpush2.bf16.msra.mxu0 0
      %531 = vmatprep.mubr.bf16.mxu0 0
      %532 = vmatmul.mubr.bf16.gmra.mxu0 %v494
      %v533 = vpop.f32.mrf.mxu0
      %v534 = vadd.f32 0.0, %v533
      %v535 = vpop.f32.mrf.mxu0
      %v536 = vadd.f32 0.0, %v535
      %v537 = vpop.f32.mrf.mxu0
      %v538 = vadd.f32 0.0, %v537
      %v539 = vpop.f32.mrf.mxu0
      %v540 = vadd.f32 0.0, %v539
      %541 = vmatprep.mubr.bf16.mxu0 0
      %542 = vmatmul.mubr.bf16.gmra.mxu0 %v497
      %v543 = vpop.f32.mrf.mxu0
      %v544 = vadd.f32 0.0, %v543
      %v545 = vpop.f32.mrf.mxu0
      %v546 = vadd.f32 0.0, %v545
      %v547 = vpop.f32.mrf.mxu0
      %v548 = vadd.f32 0.0, %v547
      %v549 = vpop.f32.mrf.mxu0
      %v550 = vadd.f32 0.0, %v549
      %551 = vdwg.mxu0
      %552 = vmatprep.subr.bf16.mxu0 0
      %553 = vmatpush1.bf16.msra.mxu0 0
      %554 = vmatprep.subr.bf16.mxu0 0
      %555 = vmatpush1.bf16.msra.mxu0 0
      %556 = vmatprep.subr.bf16.mxu0 0
      %557 = vmatpush1.bf16.msra.mxu0 0
      %558 = vmatprep.subr.bf16.mxu0 0
      %559 = vmatpush1.bf16.msra.mxu0 0
      %560 = vmatprep.subr.bf16.mxu0 %v475
      %561 = vmatpush1.bf16.msra.mxu0 %v474
      %562 = vmatprep.subr.bf16.mxu0 %v469
      %563 = vmatpush1.bf16.msra.mxu0 %v468
      %564 = vmatprep.subr.bf16.mxu0 %v463
      %565 = vmatpush1.bf16.msra.mxu0 %v462
      %566 = vmatprep.subr.bf16.mxu0 %v457
      %567 = vmatpush1.bf16.msra.mxu0 %v456
      %568 = vmatprep.subr.bf16.mxu0 0
      %569 = vmatpush2.bf16.msra.mxu0 0
      %570 = vmatprep.subr.bf16.mxu0 0
      %571 = vmatpush2.bf16.msra.mxu0 0
      %572 = vmatprep.subr.bf16.mxu0 0
      %573 = vmatpush2.bf16.msra.mxu0 0
      %574 = vmatprep.subr.bf16.mxu0 0
      %575 = vmatpush2.bf16.msra.mxu0 0
      %576 = vmatprep.subr.bf16.mxu0 0
      %577 = vmatpush2.bf16.msra.mxu0 0
      %578 = vmatprep.subr.bf16.mxu0 0
      %579 = vmatpush2.bf16.msra.mxu0 0
      %580 = vmatprep.subr.bf16.mxu0 0
      %581 = vmatpush2.bf16.msra.mxu0 0
      %582 = vmatprep.subr.bf16.mxu0 0
      %583 = vmatpush2.bf16.msra.mxu0 0
      %584 = vmatprep.mubr.bf16.mxu0 0
      %585 = vmatmul.mubr.bf16.gmra.mxu0 %v494
      %v586 = vpop.f32.mrf.mxu0
      %v587 = vadd.f32 0.0, %v586
      %v588 = vpop.f32.mrf.mxu0
      %v589 = vadd.f32 0.0, %v588
      %v590 = vpop.f32.mrf.mxu0
      %v591 = vadd.f32 0.0, %v590
      %v592 = vpop.f32.mrf.mxu0
      %v593 = vadd.f32 0.0, %v592
      %594 = vmatprep.mubr.bf16.mxu0 0
      %595 = vmatmul.mubr.bf16.gmra.mxu0 %v497
      %v596 = vpop.f32.mrf.mxu0
      %v597 = vadd.f32 0.0, %v596
      %v598 = vpop.f32.mrf.mxu0
      %v599 = vadd.f32 0.0, %v598
      %v600 = vpop.f32.mrf.mxu0
      %v601 = vadd.f32 0.0, %v600
      %v602 = vpop.f32.mrf.mxu0
      %v603 = vadd.f32 0.0, %v602
      %604 = vdwg.mxu0
      %605 = vmatprep.subr.bf16.mxu0 0
      %606 = vmatpush1.bf16.msra.mxu0 0
      %607 = vmatprep.subr.bf16.mxu0 0
      %608 = vmatpush1.bf16.msra.mxu0 0
      %609 = vmatprep.subr.bf16.mxu0 0
      %610 = vmatpush1.bf16.msra.mxu0 0
      %611 = vmatprep.subr.bf16.mxu0 0
      %612 = vmatpush1.bf16.msra.mxu0 0
      %613 = vmatprep.subr.bf16.mxu0 %v477
      %614 = vmatpush1.bf16.msra.mxu0 %v476
      %615 = vmatprep.subr.bf16.mxu0 %v471
      %616 = vmatpush1.bf16.msra.mxu0 %v470
      %617 = vmatprep.subr.bf16.mxu0 %v465
      %618 = vmatpush1.bf16.msra.mxu0 %v464
      %619 = vmatprep.subr.bf16.mxu0 %v459
      %620 = vmatpush1.bf16.msra.mxu0 %v458
      %621 = vmatprep.subr.bf16.mxu0 0
      %622 = vmatpush2.bf16.msra.mxu0 0
      %623 = vmatprep.subr.bf16.mxu0 0
      %624 = vmatpush2.bf16.msra.mxu0 0
      %625 = vmatprep.subr.bf16.mxu0 0
      %626 = vmatpush2.bf16.msra.mxu0 0
      %627 = vmatprep.subr.bf16.mxu0 0
      %628 = vmatpush2.bf16.msra.mxu0 0
      %629 = vmatprep.subr.bf16.mxu0 0
      %630 = vmatpush2.bf16.msra.mxu0 0
      %631 = vmatprep.subr.bf16.mxu0 0
      %632 = vmatpush2.bf16.msra.mxu0 0
      %633 = vmatprep.subr.bf16.mxu0 0
      %634 = vmatpush2.bf16.msra.mxu0 0
      %635 = vmatprep.subr.bf16.mxu0 0
      %636 = vmatpush2.bf16.msra.mxu0 0
      %637 = vmatprep.mubr.bf16.mxu0 0
      %638 = vmatmul.mubr.bf16.gmra.mxu0 %v494
      %v639 = vpop.f32.mrf.mxu0
      %v640 = vadd.f32 0.0, %v639
      %v641 = vpop.f32.mrf.mxu0
      %v642 = vadd.f32 0.0, %v641
      %v643 = vpop.f32.mrf.mxu0
      %v644 = vadd.f32 0.0, %v643
      %v645 = vpop.f32.mrf.mxu0
      %v646 = vadd.f32 0.0, %v645
      %647 = vmatprep.mubr.bf16.mxu0 0
      %648 = vmatmul.mubr.bf16.gmra.mxu0 %v497
      %v649 = vpop.f32.mrf.mxu0
      %v650 = vadd.f32 0.0, %v649
      %v651 = vpop.f32.mrf.mxu0
      %v652 = vadd.f32 0.0, %v651
      %v653 = vpop.f32.mrf.mxu0
      %v654 = vadd.f32 0.0, %v653
      %v655 = vpop.f32.mrf.mxu0
      %v656 = vadd.f32 0.0, %v655
      %657 = vdwg.mxu0
      %658 = vst [vmem:[%s239] sm:$0xff] %v534
      %659 = vst [vmem:[%s239 + $0x8] sm:$0xff] %v536
      %660 = vst [vmem:[%s239 + $0x10] sm:$0xff] %v587
      %661 = vst [vmem:[%s239 + $0x18] sm:$0xff] %v589
      %662 = vst [vmem:[%s239 + $0x20] sm:$0xff] %v640
      %663 = vst [vmem:[%s239 + $0x28] sm:$0xff] %v642
      %664 = vst [vmem:[%s239 + $0x30] sm:$0xff] %v538
      %665 = vst [vmem:[%s239 + $0x38] sm:$0xff] %v540
      %666 = vst [vmem:[%s239 + $0x40] sm:$0xff] %v591
      %667 = vst [vmem:[%s239 + $0x48] sm:$0xff] %v593
      %668 = vst [vmem:[%s239 + $0x50] sm:$0xff] %v644
      %669 = vst [vmem:[%s239 + $0x58] sm:$0xff] %v646
      %670 = vst [vmem:[%s239 + $0x60] sm:$0xff] %v544
      %671 = vst [vmem:[%s239 + $0x68] sm:$0xff] %v546
      %672 = vst [vmem:[%s239 + $0x70] sm:$0xff] %v597
      %673 = vst [vmem:[%s239 + $0x78] sm:$0xff] %v599
      %674 = vst [vmem:[%s239 + $0x80] sm:$0xff] %v650
      %675 = vst [vmem:[%s239 + $0x88] sm:$0xff] %v652
      %676 = vst [vmem:[%s239 + $0x90] sm:$0xff] %v548
      %677 = vst [vmem:[%s239 + $0x98] sm:$0xff] %v550
      %678 = vst [vmem:[%s239 + $0xa0] sm:$0xff] %v601
      %679 = vst [vmem:[%s239 + $0xa8] sm:$0xff] %v603
      %680 = vst [vmem:[%s239 + $0xb0] sm:$0xff] %v654
      %681 = vst [vmem:[%s239 + $0xb8] sm:$0xff] %v656
      %v682 = vld [vmem:[%s2] sm:$0x3f]
      %v684 = vlaneseq
      %v685 = vshrl.u32 %v684, 7
      %v686 = vsub.s32 0, %v685
      %v687 = vrot.slane %v682, %v686
      %v688 = vlaneseq
      %v689 = vshrl.u32 %v688, 7
      %v690 = vsub.s32 1, %v689
      %v691 = vrot.slane %v682, %v690
      %v692 = vlaneseq
      %v693 = vshrl.u32 %v692, 7
      %v694 = vsub.s32 2, %v693
      %v695 = vrot.slane %v682, %v694
      %v696 = vlaneseq
      %v697 = vshrl.u32 %v696, 7
      %v698 = vsub.s32 3, %v697
      %v699 = vrot.slane %v682, %v698
      %v700 = vlaneseq
      %v701 = vshrl.u32 %v700, 7
      %v702 = vsub.s32 4, %v701
      %v703 = vrot.slane %v682, %v702
      %v704 = vlaneseq
      %v705 = vshrl.u32 %v704, 7
      %v706 = vsub.s32 5, %v705
      %v707 = vrot.slane %v682, %v706
      %v714 = vmul.f32 %v534, %v687
      %v715 = vmul.f32 %v536, %v691
      %v716 = vmul.f32 %v587, %v695
      %v717 = vmul.f32 %v589, %v699
      %v718 = vmul.f32 %v640, %v703
      %v719 = vmul.f32 %v642, %v707
      %v720 = vmul.f32 %v538, %v687
      %v721 = vmul.f32 %v540, %v691
      %v722 = vmul.f32 %v591, %v695
      %v723 = vmul.f32 %v593, %v699
      %v724 = vmul.f32 %v644, %v703
      %v725 = vmul.f32 %v646, %v707
      %v726 = vmul.f32 %v544, %v687
      %v727 = vmul.f32 %v546, %v691
      %v728 = vmul.f32 %v597, %v695
      %v729 = vmul.f32 %v599, %v699
      %v730 = vmul.f32 %v650, %v703
      %v731 = vmul.f32 %v652, %v707
      %v732 = vmul.f32 %v548, %v687
      %v733 = vmul.f32 %v550, %v691
      %v734 = vmul.f32 %v601, %v695
      %v735 = vmul.f32 %v603, %v699
      %v736 = vmul.f32 %v654, %v703
      %v737 = vmul.f32 %v656, %v707
      %v738 = vadd.f32 %v714, %v715
      %v739 = vadd.f32 %v738, %v716
      %v740 = vadd.f32 %v739, %v717
      %v741 = vadd.f32 %v740, %v718
      %v742 = vadd.f32 %v741, %v719
      %743 = vadd.xlane.f32.xlu0 %v742
      %v744 = vpop.xlane.xlu0 %743
      %v745 = vadd.f32 %v720, %v721
      %v746 = vadd.f32 %v745, %v722
      %v747 = vadd.f32 %v746, %v723
      %v748 = vadd.f32 %v747, %v724
      %v749 = vadd.f32 %v748, %v725
      %750 = vadd.xlane.f32.xlu0 %v749
      %v751 = vpop.xlane.xlu0 %750
      %v752 = vadd.f32 %v726, %v727
      %v753 = vadd.f32 %v752, %v728
      %v754 = vadd.f32 %v753, %v729
      %v755 = vadd.f32 %v754, %v730
      %v756 = vadd.f32 %v755, %v731
      %757 = vadd.xlane.f32.xlu0 %v756
      %v758 = vpop.xlane.xlu0 %757
      %v759 = vadd.f32 %v732, %v733
      %v760 = vadd.f32 %v759, %v734
      %v761 = vadd.f32 %v760, %v735
      %v762 = vadd.f32 %v761, %v736
      %v763 = vadd.f32 %v762, %v737
      %764 = vadd.xlane.f32.xlu0 %v763
      %v765 = vpop.xlane.xlu0 %764
      %vm766 = vcmask 7168
      %767 = vst.msk [vmem:[%s244] sm:$0xff] %vm766, %v744
      %768 = vst.msk [vmem:[%s244 + $0x8] sm:$0xff] %vm766, %v751
      %769 = vst.msk [vmem:[%s244 + $0x10] sm:$0xff] %vm766, %v758
      %770 = vst.msk [vmem:[%s244 + $0x18] sm:$0xff] %vm766, %v765
      %v771 = vmul.f32 %v714, %v534
      %v772 = vmul.f32 %v715, %v536
      %v773 = vmul.f32 %v716, %v587
      %v774 = vmul.f32 %v717, %v589
      %v775 = vmul.f32 %v718, %v640
      %v776 = vmul.f32 %v719, %v642
      %v777 = vmul.f32 %v720, %v538
      %v778 = vmul.f32 %v721, %v540
      %v779 = vmul.f32 %v722, %v591
      %v780 = vmul.f32 %v723, %v593
      %v781 = vmul.f32 %v724, %v644
      %v782 = vmul.f32 %v725, %v646
      %v783 = vmul.f32 %v726, %v544
      %v784 = vmul.f32 %v727, %v546
      %v785 = vmul.f32 %v728, %v597
      %v786 = vmul.f32 %v729, %v599
      %v787 = vmul.f32 %v730, %v650
      %v788 = vmul.f32 %v731, %v652
      %v789 = vmul.f32 %v732, %v548
      %v790 = vmul.f32 %v733, %v550
      %v791 = vmul.f32 %v734, %v601
      %v792 = vmul.f32 %v735, %v603
      %v793 = vmul.f32 %v736, %v654
      %v794 = vmul.f32 %v737, %v656
      %v795 = vadd.f32 %v771, %v772
      %v796 = vadd.f32 %v795, %v773
      %v797 = vadd.f32 %v796, %v774
      %v798 = vadd.f32 %v797, %v775
      %v799 = vadd.f32 %v798, %v776
      %800 = vadd.xlane.f32.xlu0 %v799
      %v801 = vpop.xlane.xlu0 %800
      %v802 = vadd.f32 %v777, %v778
      %v803 = vadd.f32 %v802, %v779
      %v804 = vadd.f32 %v803, %v780
      %v805 = vadd.f32 %v804, %v781
      %v806 = vadd.f32 %v805, %v782
      %807 = vadd.xlane.f32.xlu0 %v806
      %v808 = vpop.xlane.xlu0 %807
      %v809 = vadd.f32 %v783, %v784
      %v810 = vadd.f32 %v809, %v785
      %v811 = vadd.f32 %v810, %v786
      %v812 = vadd.f32 %v811, %v787
      %v813 = vadd.f32 %v812, %v788
      %814 = vadd.xlane.f32.xlu0 %v813
      %v815 = vpop.xlane.xlu0 %814
      %v816 = vadd.f32 %v789, %v790
      %v817 = vadd.f32 %v816, %v791
      %v818 = vadd.f32 %v817, %v792
      %v819 = vadd.f32 %v818, %v793
      %v820 = vadd.f32 %v819, %v794
      %821 = vadd.xlane.f32.xlu0 %v820
      %v822 = vpop.xlane.xlu0 %821
      %823 = vst.msk [vmem:[%s249] sm:$0xff] %vm766, %v801
      %824 = vst.msk [vmem:[%s249 + $0x8] sm:$0xff] %vm766, %v808
      %825 = vst.msk [vmem:[%s249 + $0x10] sm:$0xff] %vm766, %v815
      %826 = vst.msk [vmem:[%s249 + $0x18] sm:$0xff] %vm766, %v822
      %p827 = scmp.lt.s32.totalorder %s17, 1
      %s828 = scalar_select %p827, %s17, 1
      %s829 = smul.addr %s828, 24
      %s830 = smul.addr %s829, 8
      %s831 = scalar_lea.vmem %s3, %s830
      %p832 = scmp.lt.s32.totalorder %s17, 1
      %s833 = scalar_select %p832, %s17, 1
      %s834 = smul.addr %s833, 4
      %s835 = smul.addr %s834, 8
      %s836 = scalar_lea.vmem %s4, %s835
      %p837 = scmp.lt.s32.totalorder %s17, 1
      %s838 = scalar_select %p837, %s17, 1
      %s839 = smul.addr %s838, 4
      %s840 = smul.addr %s839, 8
      %s841 = scalar_lea.vmem %s5, %s840
      // Predicated region
      $region33: #{up_res3d_forward.2} parent=31 // pred_check
        %p842 = pneg %p103
      $region34: #{up_res3d_forward.2} parent=31 // pred_check_branch
        %844 = sbr.rel (%p842) target = $region36
      $region35: #{up_res3d_forward.2} parent=31 // pred_region
        _
      $region36: #{up_res3d_forward.2} parent=31 // pred_fallthru
        _
      // Predicated region
      $region37: #{up_res3d_forward.2} parent=31 // pred_check
        %p845 = pneg %p129
      $region38: #{up_res3d_forward.2} parent=31 // pred_check_branch
        %847 = sbr.rel (%p845) target = $region40
      $region39: #{up_res3d_forward.2} parent=31 // pred_region
        _
      $region40: #{up_res3d_forward.2} parent=31 // pred_fallthru
        _
      // Predicated region
      $region41: #{up_res3d_forward.2} parent=31 // pred_check
        %p848 = pneg %p155
      $region42: #{up_res3d_forward.2} parent=31 // pred_check_branch
        %850 = sbr.rel (%p848) target = $region44
      $region43: #{up_res3d_forward.2} parent=31 // pred_region
        _
      $region44: #{up_res3d_forward.2} parent=31 // pred_fallthru
        _
    $region32: #{up_res3d_forward.2} parent=5 // pred_fallthru
      _
    %p851 = scmp.le.s32.totalorder 2, %s12
    // Predicated region
    $region45: #{up_res3d_forward.2} parent=5 // pred_check
      %p852 = pneg %p851
    $region46: #{up_res3d_forward.2} parent=5 // pred_check_branch
      %854 = sbr.rel (%p852) target = $region48
    $region47: #{up_res3d_forward.2} parent=5 // pred_region
      %s855 = ssub.s32 %s12, 2
      // Predicated region
      $region49: #{up_res3d_forward.2} parent=47 // pred_check
        %p856 = pneg %p109
      $region50: #{up_res3d_forward.2} parent=47 // pred_check_branch
        %858 = sbr.rel (%p856) target = $region52
      $region51: #{up_res3d_forward.2} parent=47 // pred_region
        %p859 = scmp.lt.s32.totalorder %s18, 1
        %s860 = scalar_select %p859, %s18, 1
        %s861 = smul.addr %s860, 24
        %s862 = smul.addr %s861, 8
        %s863 = scalar_lea.vmem %s3, %s862
      $region52: #{up_res3d_forward.2} parent=47 // pred_fallthru
        _
      // Predicated region
      $region53: #{up_res3d_forward.2} parent=47 // pred_check
        %p864 = pneg %p135
      $region54: #{up_res3d_forward.2} parent=47 // pred_check_branch
        %866 = sbr.rel (%p864) target = $region56
      $region55: #{up_res3d_forward.2} parent=47 // pred_region
        %p867 = scmp.lt.s32.totalorder %s18, 1
        %s868 = scalar_select %p867, %s18, 1
        %s869 = smul.addr %s868, 4
        %s870 = smul.addr %s869, 8
        %s871 = scalar_lea.vmem %s4, %s870
      $region56: #{up_res3d_forward.2} parent=47 // pred_fallthru
        _
      // Predicated region
      $region57: #{up_res3d_forward.2} parent=47 // pred_check
        %p872 = pneg %p161
      $region58: #{up_res3d_forward.2} parent=47 // pred_check_branch
        %874 = sbr.rel (%p872) target = $region60
      $region59: #{up_res3d_forward.2} parent=47 // pred_region
        %p875 = scmp.lt.s32.totalorder %s18, 1
        %s876 = scalar_select %p875, %s18, 1
        %s877 = smul.addr %s876, 4
        %s878 = smul.addr %s877, 8
        %s879 = scalar_lea.vmem %s5, %s878
      $region60: #{up_res3d_forward.2} parent=47 // pred_fallthru
        _
    $region48: #{up_res3d_forward.2} parent=5 // pred_fallthru
      _
  $region6: #{up_res3d_forward.2} parent=0 // loop_footer
    %s16 = sadd.s32 1, %s12
  $region7: #{up_res3d_forward.2} parent=0 // loop_footer_branch
    %11 = sbr.rel target = $region3
  $region8: #{up_res3d_forward.2} parent=0 // loop_exit
    _

// kernel: up_res3d_forward.3
$region0: #{up_res3d_forward.3}
  #allocation0 [shape = 'u32[]', space=smem, size = 0x4, offset = 0x4, fixed_abs, tag = 'smem constant byte address 0x4 - core index']
  #allocation1 [shape = 'u32[144,128]{1,0:T(1,128)}', space=vmem, size = 0x12000, scoped, tag = 'internal scratch']
  %s0 = inlined_call_operand.vmem [shape: f32[2,4,16,256], index: 0, kind: input, shape index: {}]
  %s1 = inlined_call_operand.vmem [shape: f32[2,4,16,256], index: 1, kind: input, shape index: {}, may-alias: {1,4}]
  %s2 = inlined_call_operand.vmem [shape: f32[1,4,1,1], index: 2, kind: input, shape index: {}]
  %s3 = inlined_call_operand.vmem [shape: f32[1,4,1,1], index: 3, kind: input, shape index: {}]
  %s4 = inlined_call_operand.vmem [shape: f32[2,4,16,256], index: 4, kind: output, shape index: {}, may-alias: {1,4}]
  %s5 = sld [smem:[#allocation0]]
  $region114: #{up_res3d_forward.3} parent=0
    _
  %s7 = ssub.s32 1, %s5
  %s8 = scalar_select 0, %s7, %s5
  $region1: #{up_res3d_forward.3} parent=0
    #allocation2 [shape = 'u8[65536]{0}', space=vmem, size = 0x10000, scoped, tag = 'input window, operand 0']
    #allocation3 [shape = 'u8[65536]{0}', space=vmem, size = 0x10000, scoped, tag = 'input window, operand 1']
    #allocation4 [shape = 'u8[65536]{0}', space=vmem, size = 0x10000, scoped, tag = 'output window, operand 0']
    loop: start=0, step=1, limit=6
    $region2: #{up_res3d_forward.3} parent=1 // loop_pre_header
      _
    $region3: #{up_res3d_forward.3} parent=1 // loop_header
      %s10 = sphi 0, %s14
      %p11 = scmp.ge.s32.totalorder %s10, 6
      %s17 = sphi 0, %s29
      %s18 = sphi 0, %s25
      %s19 = sphi 0, %s17
      %s20 = sphi 0, %s18
      %s21 = sphi 0, %s19
      %s22 = sphi 0, %s20
      %s34 = sphi 0, %s36
      %s37 = sphi 0, %s34
      %s38 = sphi 0, %s37
      %s54 = sphi 0, %s38
      %s62 = sphi 0, %s64
      %s65 = sphi 0, %s62
      %s66 = sphi 0, %s65
      %s82 = sphi 0, %s66
      %s86 = sphi 0, %s86
      %s88 = sphi 0, %s86
      %s89 = sphi 0, %s88
      %s103 = sphi 0, %s89
      %s107 = sphi 0, %s107
      %s109 = sphi 0, %s107
      %s110 = sphi 0, %s109
      %s124 = sphi 0, %s110
      %s132 = sphi 0, %s134
      %s135 = sphi 0, %s132
      %s136 = sphi 0, %s135
      %s152 = sphi 0, %s136
    $region4: #{up_res3d_forward.3} parent=1 // loop_header_branch
      %13 = sbr.rel (%p11) target = $region8
    $region5: #{up_res3d_forward.3} parent=1 // loop_body
      %s15 = ssub.s32 %s10, 1
      %s16 = ssub.s32 %s10, 2
      %s23 = sadd.s32 1, %s18
      %p24 = scmp.ge.s32.totalorder %s23, 2
      %s25 = scalar_select %p24, 0, %s23
      %s26 = sadd.s32 1, %s17
      %s27 = scalar_select %p24, %s26, %s17
      %p28 = scmp.ge.s32.totalorder %s27, 2
      %s29 = scalar_select %p28, 0, %s27
      %s30 = ssub.s32 %s17, %s29
      %s31 = ssub.s32 %s18, %s25
      %s32 = sor.u32 %s30, %s31
      %p33 = scmp.eq.s32.totalorder %s32, 0
      %s35 = sadd.s32 %s34, 1
      %s36 = scalar_select %p33, %s34, %s35
      %p39 = pneg %p33
      %p40 = scmp.eq.s32.totalorder %s10, 3
      %p41 = por %p39, %p40
      %p42 = scmp.ne.s32.totalorder %s34, %s37
      %p43 = scmp.eq.s32.totalorder %s10, 0
      %p44 = por %p42, %p43
      %p45 = scmp.ne.s32.totalorder %s34, %s37
      %p46 = scmp.eq.s32.totalorder %s15, 3
      %p47 = por %p45, %p46
      %p48 = scmp.ne.s32.totalorder %s37, %s38
      %p49 = scmp.eq.s32.totalorder %s15, 0
      %p50 = por %p48, %p49
      %p51 = scmp.ne.s32.totalorder %s37, %s38
      %p52 = scmp.eq.s32.totalorder %s16, 3
      %p53 = por %p51, %p52
      %p55 = scmp.ne.s32.totalorder %s38, %s54
      %p56 = scmp.eq.s32.totalorder %s16, 0
      %p57 = por %p55, %p56
      %s58 = ssub.s32 %s17, %s29
      %s59 = ssub.s32 %s18, %s25
      %s60 = sor.u32 %s58, %s59
      %p61 = scmp.eq.s32.totalorder %s60, 0
      %s63 = sadd.s32 %s62, 1
      %s64 = scalar_select %p61, %s62, %s63
      %p67 = pneg %p61
      %p68 = scmp.eq.s32.totalorder %s10, 3
      %p69 = por %p67, %p68
      %p70 = scmp.ne.s32.totalorder %s62, %s65
      %p71 = scmp.eq.s32.totalorder %s10, 0
      %p72 = por %p70, %p71
      %p73 = scmp.ne.s32.totalorder %s62, %s65
      %p74 = scmp.eq.s32.totalorder %s15, 3
      %p75 = por %p73, %p74
      %p76 = scmp.ne.s32.totalorder %s65, %s66
      %p77 = scmp.eq.s32.totalorder %s15, 0
      %p78 = por %p76, %p77
      %p79 = scmp.ne.s32.totalorder %s65, %s66
      %p80 = scmp.eq.s32.totalorder %s16, 3
      %p81 = por %p79, %p80
      %p83 = scmp.ne.s32.totalorder %s66, %s82
      %p84 = scmp.eq.s32.totalorder %s16, 0
      %p85 = por %p83, %p84
      %s87 = sadd.s32 %s86, 1
      %p90 = scmp.eq.s32.totalorder %s10, 3
      %p91 = scmp.ne.s32.totalorder %s86, %s88
      %p92 = scmp.eq.s32.totalorder %s10, 0
      %p93 = por %p91, %p92
      %p94 = scmp.ne.s32.totalorder %s86, %s88
      %p95 = scmp.eq.s32.totalorder %s15, 3
      %p96 = por %p94, %p95
      %p97 = scmp.ne.s32.totalorder %s88, %s89
      %p98 = scmp.eq.s32.totalorder %s15, 0
      %p99 = por %p97, %p98
      %p100 = scmp.ne.s32.totalorder %s88, %s89
      %p101 = scmp.eq.s32.totalorder %s16, 3
      %p102 = por %p100, %p101
      %p104 = scmp.ne.s32.totalorder %s89, %s103
      %p105 = scmp.eq.s32.totalorder %s16, 0
      %p106 = por %p104, %p105
      %s108 = sadd.s32 %s107, 1
      %p111 = scmp.eq.s32.totalorder %s10, 3
      %p112 = scmp.ne.s32.totalorder %s107, %s109
      %p113 = scmp.eq.s32.totalorder %s10, 0
      %p114 = por %p112, %p113
      %p115 = scmp.ne.s32.totalorder %s107, %s109
      %p116 = scmp.eq.s32.totalorder %s15, 3
      %p117 = por %p115, %p116
      %p118 = scmp.ne.s32.totalorder %s109, %s110
      %p119 = scmp.eq.s32.totalorder %s15, 0
      %p120 = por %p118, %p119
      %p121 = scmp.ne.s32.totalorder %s109, %s110
      %p122 = scmp.eq.s32.totalorder %s16, 3
      %p123 = por %p121, %p122
      %p125 = scmp.ne.s32.totalorder %s110, %s124
      %p126 = scmp.eq.s32.totalorder %s16, 0
      %p127 = por %p125, %p126
      %s128 = ssub.s32 %s17, %s29
      %s129 = ssub.s32 %s18, %s25
      %s130 = sor.u32 %s128, %s129
      %p131 = scmp.eq.s32.totalorder %s130, 0
      %s133 = sadd.s32 %s132, 1
      %s134 = scalar_select %p131, %s132, %s133
      %p137 = pneg %p131
      %p138 = scmp.eq.s32.totalorder %s10, 3
      %p139 = por %p137, %p138
      %p140 = scmp.ne.s32.totalorder %s132, %s135
      %p141 = scmp.eq.s32.totalorder %s10, 0
      %p142 = por %p140, %p141
      %p143 = scmp.ne.s32.totalorder %s132, %s135
      %p144 = scmp.eq.s32.totalorder %s15, 3
      %p145 = por %p143, %p144
      %p146 = scmp.ne.s32.totalorder %s135, %s136
      %p147 = scmp.eq.s32.totalorder %s15, 0
      %p148 = por %p146, %p147
      %p149 = scmp.ne.s32.totalorder %s135, %s136
      %p150 = scmp.eq.s32.totalorder %s16, 3
      %p151 = por %p149, %p150
      %p153 = scmp.ne.s32.totalorder %s136, %s152
      %p154 = scmp.eq.s32.totalorder %s16, 0
      %p155 = por %p153, %p154
      %p156 = scmp.le.s32.totalorder 1, %s10
      %p157 = scmp.lt.s32.totalorder %s10, 5
      %p158 = pnand %p156, %p157
      %p159 = pneg %p158
      // Predicated region
      $region9: #{up_res3d_forward.3} parent=5 // pred_check
        _
      $region10: #{up_res3d_forward.3} parent=5 // pred_check_branch
        %161 = sbr.rel (%p158) target = $region12
      $region11: #{up_res3d_forward.3} parent=5 // pred_region
        %s162 = ssub.s32 %s10, 1
        // Predicated region
        $region13: #{up_res3d_forward.3} parent=11 // pred_check
          %p163 = pneg %p99
        $region14: #{up_res3d_forward.3} parent=11 // pred_check_branch
          %165 = sbr.rel (%p163) target = $region16
        $region15: #{up_res3d_forward.3} parent=11 // pred_region
          _
        $region16: #{up_res3d_forward.3} parent=11 // pred_fallthru
          _
        // Predicated region
        $region17: #{up_res3d_forward.3} parent=11 // pred_check
          %p166 = pneg %p120
        $region18: #{up_res3d_forward.3} parent=11 // pred_check_branch
          %168 = sbr.rel (%p166) target = $region20
        $region19: #{up_res3d_forward.3} parent=11 // pred_region
          _
        $region20: #{up_res3d_forward.3} parent=11 // pred_fallthru
          _
      $region12: #{up_res3d_forward.3} parent=5 // pred_fallthru
        _
      %p169 = scmp.lt.s32.totalorder %s10, 4
      // Predicated region
      $region21: #{up_res3d_forward.3} parent=5 // pred_check
        %p170 = pneg %p169
      $region22: #{up_res3d_forward.3} parent=5 // pred_check_branch
        %172 = sbr.rel (%p170) target = $region24
      $region23: #{up_res3d_forward.3} parent=5 // pred_region
        // Predicated region
        $region25: #{up_res3d_forward.3} parent=23 // pred_check
          %p173 = pneg %p44
        $region26: #{up_res3d_forward.3} parent=23 // pred_check_branch
          %175 = sbr.rel (%p173) target = $region28
        $region27: #{up_res3d_forward.3} parent=23 // pred_region
          %s176 = sand.u32 %s34, 1
          %s177 = sand.u32 %s34, 1
          %s178 = smul.addr %s177, 64
          %s179 = scalar_lea.vmem [#allocation2], %s178
          %s180 = smul.addr %s18, 2
          %s181 = smul.addr %s17, 16
          %s182 = sadd.s32 %s180, %s181
          %s183 = smul.addr %s182, 8
          %s184 = scalar_lea.vmem %s0, %s183
          // Predicated region
          $region29: #{up_res3d_forward.3} parent=27 // pred_check
            _
          $region30: #{up_res3d_forward.3} parent=27 // pred_check_branch
            %186 = sbr.rel (0) target = $region32
          $region31: #{up_res3d_forward.3} parent=27 // pred_region
            // Predicated region
            $region33: #{up_res3d_forward.3} parent=31 // pred_check
              _
            $region34: #{up_res3d_forward.3} parent=31 // pred_check_branch
              %188 = sbr.rel (0) target = $region36
            $region35: #{up_res3d_forward.3} parent=31 // pred_region
              loop: start=0, step=1, limit=1
              $region37: #{up_res3d_forward.3} parent=35 // loop_pre_header
                _
              $region38: #{up_res3d_forward.3} parent=35 // loop_header
                %s190 = sphi 0, %s194
                %p191 = scmp.ge.s32.totalorder %s190, 1
                %s195 = sphi %s184, %s184
                %s196 = sphi %s179, %s179
              $region39: #{up_res3d_forward.3} parent=35 // loop_header_branch
                %193 = sbr.rel (%p191) target = $region43
              $region40: #{up_res3d_forward.3} parent=35 // loop_body
                %v197 = vld [vmem:[%s195] sm:$0xff]
                %198 = vst [vmem:[%s196] sm:$0xff] %v197
                %v199 = vld [vmem:[%s195 + $0x8] sm:$0xff]
                %200 = vst [vmem:[%s196 + $0x8] sm:$0xff] %v199
                %v201 = vld [vmem:[%s195 + $0x20] sm:$0xff]
                %202 = vst [vmem:[%s196 + $0x10] sm:$0xff] %v201
                %v203 = vld [vmem:[%s195 + $0x28] sm:$0xff]
                %204 = vst [vmem:[%s196 + $0x18] sm:$0xff] %v203
                %v205 = vld [vmem:[%s195 + $0x40] sm:$0xff]
                %206 = vst [vmem:[%s196 + $0x20] sm:$0xff] %v205
                %v207 = vld [vmem:[%s195 + $0x48] sm:$0xff]
                %208 = vst [vmem:[%s196 + $0x28] sm:$0xff] %v207
                %v209 = vld [vmem:[%s195 + $0x60] sm:$0xff]
                %210 = vst [vmem:[%s196 + $0x30] sm:$0xff] %v209
                %v211 = vld [vmem:[%s195 + $0x68] sm:$0xff]
                %212 = vst [vmem:[%s196 + $0x38] sm:$0xff] %v211
              $region41: #{up_res3d_forward.3} parent=35 // loop_footer
                %s194 = sadd.s32 1, %s190
              $region42: #{up_res3d_forward.3} parent=35 // loop_footer_branch
                %189 = sbr.rel target = $region38
              $region43: #{up_res3d_forward.3} parent=35 // loop_exit
                _
            $region36: #{up_res3d_forward.3} parent=31 // pred_fallthru
              _
            // Predicated region
            $region44: #{up_res3d_forward.3} parent=31 // pred_check
              _
            $region45: #{up_res3d_forward.3} parent=31 // pred_check_branch
              %214 = sbr.rel target = $region47
            $region46: #{up_res3d_forward.3} parent=31 // pred_region
              _
            $region47: #{up_res3d_forward.3} parent=31 // pred_fallthru
              _
          $region32: #{up_res3d_forward.3} parent=27 // pred_fallthru
            _
          %215 = vnop
        $region28: #{up_res3d_forward.3} parent=23 // pred_fallthru
          _
        // Predicated region
        $region48: #{up_res3d_forward.3} parent=23 // pred_check
          %p216 = pneg %p72
        $region49: #{up_res3d_forward.3} parent=23 // pred_check_branch
          %218 = sbr.rel (%p216) target = $region51
        $region50: #{up_res3d_forward.3} parent=23 // pred_region
          %s219 = sand.u32 %s62, 1
          %s220 = sand.u32 %s62, 1
          %s221 = smul.addr %s220, 64
          %s222 = scalar_lea.vmem [#allocation3], %s221
          %s223 = smul.addr %s18, 2
          %s224 = smul.addr %s17, 16
          %s225 = sadd.s32 %s223, %s224
          %s226 = smul.addr %s225, 8
          %s227 = scalar_lea.vmem %s1, %s226
          // Predicated region
          $region52: #{up_res3d_forward.3} parent=50 // pred_check
            _
          $region53: #{up_res3d_forward.3} parent=50 // pred_check_branch
            %229 = sbr.rel (0) target = $region55
          $region54: #{up_res3d_forward.3} parent=50 // pred_region
            // Predicated region
            $region56: #{up_res3d_forward.3} parent=54 // pred_check
              _
            $region57: #{up_res3d_forward.3} parent=54 // pred_check_branch
              %231 = sbr.rel (0) target = $region59
            $region58: #{up_res3d_forward.3} parent=54 // pred_region
              loop: start=0, step=1, limit=1
              $region60: #{up_res3d_forward.3} parent=58 // loop_pre_header
                _
              $region61: #{up_res3d_forward.3} parent=58 // loop_header
                %s233 = sphi 0, %s237
                %p234 = scmp.ge.s32.totalorder %s233, 1
                %s238 = sphi %s227, %s227
                %s239 = sphi %s222, %s222
              $region62: #{up_res3d_forward.3} parent=58 // loop_header_branch
                %236 = sbr.rel (%p234) target = $region66
              $region63: #{up_res3d_forward.3} parent=58 // loop_body
                %v240 = vld [vmem:[%s238] sm:$0xff]
                %241 = vst [vmem:[%s239] sm:$0xff] %v240
                %v242 = vld [vmem:[%s238 + $0x8] sm:$0xff]
                %243 = vst [vmem:[%s239 + $0x8] sm:$0xff] %v242
                %v244 = vld [vmem:[%s238 + $0x20] sm:$0xff]
                %245 = vst [vmem:[%s239 + $0x10] sm:$0xff] %v244
                %v246 = vld [vmem:[%s238 + $0x28] sm:$0xff]
                %247 = vst [vmem:[%s239 + $0x18] sm:$0xff] %v246
                %v248 = vld [vmem:[%s238 + $0x40] sm:$0xff]
                %249 = vst [vmem:[%s239 + $0x20] sm:$0xff] %v248
                %v250 = vld [vmem:[%s238 + $0x48] sm:$0xff]
                %251 = vst [vmem:[%s239 + $0x28] sm:$0xff] %v250
                %v252 = vld [vmem:[%s238 + $0x60] sm:$0xff]
                %253 = vst [vmem:[%s239 + $0x30] sm:$0xff] %v252
                %v254 = vld [vmem:[%s238 + $0x68] sm:$0xff]
                %255 = vst [vmem:[%s239 + $0x38] sm:$0xff] %v254
              $region64: #{up_res3d_forward.3} parent=58 // loop_footer
                %s237 = sadd.s32 1, %s233
              $region65: #{up_res3d_forward.3} parent=58 // loop_footer_branch
                %232 = sbr.rel target = $region61
              $region66: #{up_res3d_forward.3} parent=58 // loop_exit
                _
            $region59: #{up_res3d_forward.3} parent=54 // pred_fallthru
              _
            // Predicated region
            $region67: #{up_res3d_forward.3} parent=54 // pred_check
              _
            $region68: #{up_res3d_forward.3} parent=54 // pred_check_branch
              %257 = sbr.rel target = $region70
            $region69: #{up_res3d_forward.3} parent=54 // pred_region
              _
            $region70: #{up_res3d_forward.3} parent=54 // pred_fallthru
              _
          $region55: #{up_res3d_forward.3} parent=50 // pred_fallthru
            _
          %258 = vnop
        $region51: #{up_res3d_forward.3} parent=23 // pred_fallthru
          _
      $region24: #{up_res3d_forward.3} parent=5 // pred_fallthru
        _
      %p259 = scmp.le.s32.totalorder 1, %s10
      %p260 = scmp.lt.s32.totalorder %s10, 5
      %p261 = pnand %p259, %p260
      %p262 = pneg %p261
      // Predicated region
      $region71: #{up_res3d_forward.3} parent=5 // pred_check
        _
      $region72: #{up_res3d_forward.3} parent=5 // pred_check_branch
        %264 = sbr.rel (%p261) target = $region74
      $region73: #{up_res3d_forward.3} parent=5 // pred_region
        %s265 = ssub.s32 %s10, 1
        %s266 = sand.u32 %s37, 1
        %s267 = sand.u32 %s37, 1
        %s268 = smul.addr %s267, 64
        %s269 = scalar_lea.vmem [#allocation2], %s268
        // Predicated region
        $region75: #{up_res3d_forward.3} parent=73 // pred_check
          %p270 = pneg %p50
        $region76: #{up_res3d_forward.3} parent=73 // pred_check_branch
          %272 = sbr.rel (%p270) target = $region78
        $region77: #{up_res3d_forward.3} parent=73 // pred_region
          _
        $region78: #{up_res3d_forward.3} parent=73 // pred_fallthru
          _
        %s273 = sand.u32 %s65, 1
        %s274 = sand.u32 %s65, 1
        %s275 = smul.addr %s274, 64
        %s276 = scalar_lea.vmem [#allocation3], %s275
        // Predicated region
        $region79: #{up_res3d_forward.3} parent=73 // pred_check
          %p277 = pneg %p78
        $region80: #{up_res3d_forward.3} parent=73 // pred_check_branch
          %279 = sbr.rel (%p277) target = $region82
        $region81: #{up_res3d_forward.3} parent=73 // pred_region
          _
        $region82: #{up_res3d_forward.3} parent=73 // pred_fallthru
          _
        %s280 = sand.u32 %s37, 1
        %s281 = sand.u32 %s37, 1
        %s282 = smul.addr %s281, 64
        %s283 = scalar_lea.vmem [#allocation2], %s282
        %p284 = pneg %p50
        %p285 = pneg %p47
        %s286 = sand.u32 %s65, 1
        %s287 = sand.u32 %s65, 1
        %s288 = smul.addr %s287, 64
        %s289 = scalar_lea.vmem [#allocation3], %s288
        %p290 = pneg %p78
        %p291 = pneg %p75
        %p292 = pneg %p99
        %p293 = pneg %p96
        %p294 = pneg %p120
        %p295 = pneg %p117
        %p296 = pneg %p148
        %p297 = pneg %p145
        %s298 = sand.u32 %s135, 1
        %s299 = sand.u32 %s135, 1
        %s300 = smul.addr %s299, 64
        %s301 = scalar_lea.vmem [#allocation4], %s300
        %v302 = vld [vmem:[%s269] sm:$0xff]
        %v303 = vld [vmem:[%s269 + $0x8] sm:$0xff]
        %v304 = vld [vmem:[%s269 + $0x10] sm:$0xff]
        %v305 = vld [vmem:[%s269 + $0x18] sm:$0xff]
        %v306 = vld [vmem:[%s269 + $0x20] sm:$0xff]
        %v307 = vld [vmem:[%s269 + $0x28] sm:$0xff]
        %v308 = vld [vmem:[%s269 + $0x30] sm:$0xff]
        %v309 = vld [vmem:[%s269 + $0x38] sm:$0xff]
        %v310 = vld [vmem:[%s2] sm:$0x1]
        %v311 = vld [vmem:[%s2 + $0x1] sm:$0x1]
        %v312 = vld [vmem:[%s2 + $0x2] sm:$0x1]
        %v313 = vld [vmem:[%s2 + $0x3] sm:$0x1]
        %v318 = vlaneseq
        %v319 = vshrl.u32 %v318, 7
        %v320 = vsub.s32 0, %v319
        %v321 = vrot.slane %v310, %v320
        %v322 = vlaneseq
        %v323 = vshrl.u32 %v322, 7
        %v324 = vsub.s32 0, %v323
        %v325 = vrot.slane %v311, %v324
        %v326 = vlaneseq
        %v327 = vshrl.u32 %v326, 7
        %v328 = vsub.s32 0, %v327
        %v329 = vrot.slane %v312, %v328
        %v330 = vlaneseq
        %v331 = vshrl.u32 %v330, 7
        %v332 = vsub.s32 0, %v331
        %v333 = vrot.slane %v313, %v332
        %334 = vset.pattern.permute.xlu0 0
        %335 = vperm.xlu0 %334, %v321
        %v336 = vpop.permute.xlu0 %335
        %338 = vset.pattern.permute.xlu0 0
        %339 = vperm.xlu0 %338, %v325
        %v340 = vpop.permute.xlu0 %339
        %342 = vset.pattern.permute.xlu0 0
        %343 = vperm.xlu0 %342, %v329
        %v344 = vpop.permute.xlu0 %343
        %346 = vset.pattern.permute.xlu0 0
        %347 = vperm.xlu0 %346, %v333
        %v348 = vpop.permute.xlu0 %347
        %v350 = vmul.f32 %v302, %v336
        %v351 = vmul.f32 %v303, %v336
        %v352 = vmul.f32 %v304, %v340
        %v353 = vmul.f32 %v305, %v340
        %v354 = vmul.f32 %v306, %v344
        %v355 = vmul.f32 %v307, %v344
        %v356 = vmul.f32 %v308, %v348
        %v357 = vmul.f32 %v309, %v348
        %v358 = vld [vmem:[%s3] sm:$0x1]
        %v359 = vld [vmem:[%s3 + $0x1] sm:$0x1]
        %v360 = vld [vmem:[%s3 + $0x2] sm:$0x1]
        %v361 = vld [vmem:[%s3 + $0x3] sm:$0x1]
        %v366 = vlaneseq
        %v367 = vshrl.u32 %v366, 7
        %v368 = vsub.s32 0, %v367
        %v369 = vrot.slane %v358, %v368
        %v370 = vlaneseq
        %v371 = vshrl.u32 %v370, 7
        %v372 = vsub.s32 0, %v371
        %v373 = vrot.slane %v359, %v372
        %v374 = vlaneseq
        %v375 = vshrl.u32 %v374, 7
        %v376 = vsub.s32 0, %v375
        %v377 = vrot.slane %v360, %v376
        %v378 = vlaneseq
        %v379 = vshrl.u32 %v378, 7
        %v380 = vsub.s32 0, %v379
        %v381 = vrot.slane %v361, %v380
        %382 = vset.pattern.permute.xlu0 0
        %383 = vperm.xlu0 %382, %v369
        %v384 = vpop.permute.xlu0 %383
        %386 = vset.pattern.permute.xlu0 0
        %387 = vperm.xlu0 %386, %v373
        %v388 = vpop.permute.xlu0 %387
        %390 = vset.pattern.permute.xlu0 0
        %391 = vperm.xlu0 %390, %v377
        %v392 = vpop.permute.xlu0 %391
        %394 = vset.pattern.permute.xlu0 0
        %395 = vperm.xlu0 %394, %v381
        %v396 = vpop.permute.xlu0 %395
        %v398 = vadd.f32 %v350, %v384
        %v399 = vadd.f32 %v351, %v384
        %v400 = vadd.f32 %v352, %v388
        %v401 = vadd.f32 %v353, %v388
        %v402 = vadd.f32 %v354, %v392
        %v403 = vadd.f32 %v355, %v392
        %v404 = vadd.f32 %v356, %v396
        %v405 = vadd.f32 %v357, %v396
        %vm406 = vcmp.ge.f32.partialorder %v398, 0.0
        %vm407 = vcmp.ge.f32.partialorder %v399, 0.0
        %vm408 = vcmp.ge.f32.partialorder %v400, 0.0
        %vm409 = vcmp.ge.f32.partialorder %v401, 0.0
        %vm410 = vcmp.ge.f32.partialorder %v402, 0.0
        %vm411 = vcmp.ge.f32.partialorder %v403, 0.0
        %vm412 = vcmp.ge.f32.partialorder %v404, 0.0
        %vm413 = vcmp.ge.f32.partialorder %v405, 0.0
        %v414 = vmul.f32 %v398, 0.01
        %v415 = vmul.f32 %v399, 0.01
        %v416 = vmul.f32 %v400, 0.01
        %v417 = vmul.f32 %v401, 0.01
        %v418 = vmul.f32 %v402, 0.01
        %v419 = vmul.f32 %v403, 0.01
        %v420 = vmul.f32 %v404, 0.01
        %v421 = vmul.f32 %v405, 0.01
        %v422 = vsel %vm406, %v398, %v414
        %v423 = vsel %vm407, %v399, %v415
        %v424 = vsel %vm408, %v400, %v416
        %v425 = vsel %vm409, %v401, %v417
        %v426 = vsel %vm410, %v402, %v418
        %v427 = vsel %vm411, %v403, %v419
        %v428 = vsel %vm412, %v404, %v420
        %v429 = vsel %vm413, %v405, %v421
        %v430 = vld [vmem:[%s276] sm:$0xff]
        %v431 = vld [vmem:[%s276 + $0x8] sm:$0xff]
        %v432 = vld [vmem:[%s276 + $0x10] sm:$0xff]
        %v433 = vld [vmem:[%s276 + $0x18] sm:$0xff]
        %v434 = vld [vmem:[%s276 + $0x20] sm:$0xff]
        %v435 = vld [vmem:[%s276 + $0x28] sm:$0xff]
        %v436 = vld [vmem:[%s276 + $0x30] sm:$0xff]
        %v437 = vld [vmem:[%s276 + $0x38] sm:$0xff]
        %v438 = vadd.f32 %v430, %v422
        %v439 = vadd.f32 %v431, %v423
        %v440 = vadd.f32 %v432, %v424
        %v441 = vadd.f32 %v433, %v425
        %v442 = vadd.f32 %v434, %v426
        %v443 = vadd.f32 %v435, %v427
        %v444 = vadd.f32 %v436, %v428
        %v445 = vadd.f32 %v437, %v429
        %446 = vst [vmem:[%s301] sm:$0xff] %v438
        %447 = vst [vmem:[%s301 + $0x8] sm:$0xff] %v439
        %448 = vst [vmem:[%s301 + $0x10] sm:$0xff] %v440
        %449 = vst [vmem:[%s301 + $0x18] sm:$0xff] %v441
        %450 = vst [vmem:[%s301 + $0x20] sm:$0xff] %v442
        %451 = vst [vmem:[%s301 + $0x28] sm:$0xff] %v443
        %452 = vst [vmem:[%s301 + $0x30] sm:$0xff] %v444
        %453 = vst [vmem:[%s301 + $0x38] sm:$0xff] %v445
        %s454 = sand.u32 %s135, 1
        %s455 = sand.u32 %s135, 1
        %s456 = smul.addr %s455, 64
        %s457 = scalar_lea.vmem [#allocation4], %s456
        // Predicated region
        $region83: #{up_res3d_forward.3} parent=73 // pred_check
          %p458 = pneg %p145
        $region84: #{up_res3d_forward.3} parent=73 // pred_check_branch
          %460 = sbr.rel (%p458) target = $region86
        $region85: #{up_res3d_forward.3} parent=73 // pred_region
          %s461 = smul.addr %s20, 2
          %s462 = smul.addr %s19, 16
          %s463 = sadd.s32 %s461, %s462
          %s464 = smul.addr %s463, 8
          %s465 = scalar_lea.vmem %s4, %s464
          // Predicated region
          $region87: #{up_res3d_forward.3} parent=85 // pred_check
            _
          $region88: #{up_res3d_forward.3} parent=85 // pred_check_branch
            %467 = sbr.rel (0) target = $region90
          $region89: #{up_res3d_forward.3} parent=85 // pred_region
            // Predicated region
            $region91: #{up_res3d_forward.3} parent=89 // pred_check
              _
            $region92: #{up_res3d_forward.3} parent=89 // pred_check_branch
              %469 = sbr.rel (0) target = $region94
            $region93: #{up_res3d_forward.3} parent=89 // pred_region
              loop: start=0, step=1, limit=1
              $region95: #{up_res3d_forward.3} parent=93 // loop_pre_header
                _
              $region96: #{up_res3d_forward.3} parent=93 // loop_header
                %s471 = sphi 0, %s475
                %p472 = scmp.ge.s32.totalorder %s471, 1
                %s476 = sphi %s457, %s457
                %s477 = sphi %s465, %s465
              $region97: #{up_res3d_forward.3} parent=93 // loop_header_branch
                %474 = sbr.rel (%p472) target = $region101
              $region98: #{up_res3d_forward.3} parent=93 // loop_body
                %v478 = vld [vmem:[%s476] sm:$0xff]
                %479 = vst [vmem:[%s477] sm:$0xff] %v478
                %v480 = vld [vmem:[%s476 + $0x8] sm:$0xff]
                %481 = vst [vmem:[%s477 + $0x8] sm:$0xff] %v480
                %v482 = vld [vmem:[%s476 + $0x10] sm:$0xff]
                %483 = vst [vmem:[%s477 + $0x20] sm:$0xff] %v482
                %v484 = vld [vmem:[%s476 + $0x18] sm:$0xff]
                %485 = vst [vmem:[%s477 + $0x28] sm:$0xff] %v484
                %v486 = vld [vmem:[%s476 + $0x20] sm:$0xff]
                %487 = vst [vmem:[%s477 + $0x40] sm:$0xff] %v486
                %v488 = vld [vmem:[%s476 + $0x28] sm:$0xff]
                %489 = vst [vmem:[%s477 + $0x48] sm:$0xff] %v488
                %v490 = vld [vmem:[%s476 + $0x30] sm:$0xff]
                %491 = vst [vmem:[%s477 + $0x60] sm:$0xff] %v490
                %v492 = vld [vmem:[%s476 + $0x38] sm:$0xff]
                %493 = vst [vmem:[%s477 + $0x68] sm:$0xff] %v492
              $region99: #{up_res3d_forward.3} parent=93 // loop_footer
                %s475 = sadd.s32 1, %s471
              $region100: #{up_res3d_forward.3} parent=93 // loop_footer_branch
                %470 = sbr.rel target = $region96
              $region101: #{up_res3d_forward.3} parent=93 // loop_exit
                _
            $region94: #{up_res3d_forward.3} parent=89 // pred_fallthru
              _
            // Predicated region
            $region102: #{up_res3d_forward.3} parent=89 // pred_check
              _
            $region103: #{up_res3d_forward.3} parent=89 // pred_check_branch
              %495 = sbr.rel target = $region105
            $region104: #{up_res3d_forward.3} parent=89 // pred_region
              _
            $region105: #{up_res3d_forward.3} parent=89 // pred_fallthru
              _
          $region90: #{up_res3d_forward.3} parent=85 // pred_fallthru
            _
          %496 = vnop
        $region86: #{up_res3d_forward.3} parent=73 // pred_fallthru
          _
      $region74: #{up_res3d_forward.3} parent=5 // pred_fallthru
        _
      %p497 = scmp.le.s32.totalorder 2, %s10
      // Predicated region
      $region106: #{up_res3d_forward.3} parent=5 // pred_check
        %p498 = pneg %p497
      $region107: #{up_res3d_forward.3} parent=5 // pred_check_branch
        %500 = sbr.rel (%p498) target = $region109
      $region108: #{up_res3d_forward.3} parent=5 // pred_region
        %s501 = ssub.s32 %s10, 2
        // Predicated region
        $region110: #{up_res3d_forward.3} parent=108 // pred_check
          %p502 = pneg %p151
        $region111: #{up_res3d_forward.3} parent=108 // pred_check_branch
          %504 = sbr.rel (%p502) target = $region113
        $region112: #{up_res3d_forward.3} parent=108 // pred_region
          %s505 = sand.u32 %s136, 1
          %s506 = sand.u32 %s136, 1
          %s507 = smul.addr %s506, 64
          %s508 = scalar_lea.vmem [#allocation4], %s507
        $region113: #{up_res3d_forward.3} parent=108 // pred_fallthru
          _
      $region109: #{up_res3d_forward.3} parent=5 // pred_fallthru
        _
    $region6: #{up_res3d_forward.3} parent=1 // loop_footer
      %s14 = sadd.s32 1, %s10
    $region7: #{up_res3d_forward.3} parent=1 // loop_footer_branch
      %9 = sbr.rel target = $region3
    $region8: #{up_res3d_forward.3} parent=1 // loop_exit
      _

</llo_original>
